<compile_context>
chip_gen: v7x
topology: tpu7x:2x2x1
jax: 0.10.0
libtpu: 0.0.40
codegen_flags: <defaults>
</compile_context>

<pallas_src>
import functools
import math

import jax
import jax.numpy as jnp
from jax.experimental import pallas as pl
from jax.experimental.pallas import tpu as pltpu


# -----------------------------------------------------------------------------
# Kernel 1a: GroupNorm statistics, accumulated over HW tiles.
# grid = (B, HW // thw); hw axis is an "arbitrary" accumulation axis.
# Outputs per-channel affine scale / shift (gamma/beta folded in).
# -----------------------------------------------------------------------------
def gn_stats_kernel(x_ref, gmask_ref, gmask_t_ref, gamma_ref, beta_ref,
                    scale_ref, shift_ref, sum_scr, ss_scr, *, inv_n):
    hi = pl.program_id(1)
    x = x_ref[0].astype(jnp.float32)                       # (C, thw)

    @pl.when(hi == 0)
    def _init():
        sum_scr[...] = jnp.zeros_like(sum_scr)
        ss_scr[...] = jnp.zeros_like(ss_scr)

    sum_scr[...] += jnp.sum(x, axis=1, keepdims=True)      # (C, 1)
    ss_scr[...] += jnp.sum(x * x, axis=1, keepdims=True)   # (C, 1)

    @pl.when(hi == pl.num_programs(1) - 1)
    def _finalize():
        # channel -> group reductions via tiny mask matmuls; once per image,
        # after the streaming loop, so the latency chain is not on the hot path.
        sum_g = jnp.dot(gmask_t_ref[...], sum_scr[...],
                        preferred_element_type=jnp.float32)          # (G, 1)
        ss_g = jnp.dot(gmask_t_ref[...], ss_scr[...],
                       preferred_element_type=jnp.float32)           # (G, 1)
        mean_g = sum_g * inv_n
        var_g = ss_g * inv_n - mean_g * mean_g
        inv_g = jax.lax.rsqrt(var_g + 1e-5)                          # (G, 1)
        mean_c = jnp.dot(gmask_ref[...], mean_g,
                         preferred_element_type=jnp.float32)         # (C, 1)
        inv_c = jnp.dot(gmask_ref[...], inv_g,
                        preferred_element_type=jnp.float32)          # (C, 1)
        scale_ref[0] = gamma_ref[...] * inv_c
        shift_ref[0] = beta_ref[...] - gamma_ref[...] * inv_c * mean_c


# -----------------------------------------------------------------------------
# Kernel 1b: normalize + 1x1-conv projections per HW tile.
#   q, v written spatial-major (B, HW, C); k written channel-major (B, C, HW).
#   wq (pre-scaled by C^-0.5) and wv fused into one (C, 2C) matmul.
# grid = (B, HW // thw), both axes "parallel".
# -----------------------------------------------------------------------------
def gn_proj_kernel(x_ref, scale_ref, shift_ref, wqv_ref, bqv_ref, wk_ref, bk_ref,
                   q_ref, k_ref, v_ref):
    C = x_ref.shape[1]
    x = x_ref[0].astype(jnp.float32)                       # (C, thw)
    h_f32 = x * scale_ref[0] + shift_ref[0]                # GroupNorm affine
    h = h_f32.astype(jnp.bfloat16)                         # (C, thw)

    # k: channel-major (C_out, thw) = (C_out, C_in) @ (C_in, thw)
    k = jnp.dot(wk_ref[...], h, preferred_element_type=jnp.float32) + bk_ref[...]
    k_ref[0] = k.astype(k_ref.dtype)

    # q^T / v^T: spatial-major; one transpose of h per tile (amortized over all
    # downstream query tiles), then one fused (thw, C) @ (C, 2C) matmul.
    hT = jnp.transpose(h_f32).astype(jnp.bfloat16)         # (thw, C)
    qv = jnp.dot(hT, wqv_ref[...],
                 preferred_element_type=jnp.float32) + bqv_ref[...]  # (thw, 2C)
    q_ref[0] = qv[:, :C].astype(q_ref.dtype)
    v_ref[0] = qv[:, C:].astype(v_ref.dtype)


# -----------------------------------------------------------------------------
# Kernel 2: flash-style attention + output projection + residual.
# grid = (B, HW // tq, HW // tk); online softmax over the key axis (last, arbitrary).
# K/V are per-image VMEM-resident when kv_resident=True (key tile sliced in-kernel).
# -----------------------------------------------------------------------------
def flash_attn_kernel(q_ref, k_ref, v_ref, xres_ref, wpt_ref, bp_ref, o_ref,
                      m_scr, l_scr, acc_scr, *, tk, kv_resident):
    ki = pl.program_id(2)
    nk = pl.num_programs(2)

    @pl.when(ki == 0)
    def _init():
        m_scr[...] = jnp.full_like(m_scr, -jnp.inf)
        l_scr[...] = jnp.zeros_like(l_scr)
        acc_scr[...] = jnp.zeros_like(acc_scr)

    if kv_resident:
        off = pl.multiple_of(ki * tk, tk)
        k_tile = k_ref[0, :, pl.ds(off, tk)]               # (C, tk)   sliced load
        v_tile = v_ref[0, pl.ds(off, tk), :]                # (tk, C)   sliced load
    else:
        k_tile = k_ref[0]                                   # (C, tk)
        v_tile = v_ref[0]                                   # (tk, C)

    # scores: (tq, tk) = (tq, C) @ (C, tk).  q already carries the C^-0.5 scale.
    s = jnp.dot(q_ref[0], k_tile, preferred_element_type=jnp.float32)

    m_prev = m_scr[...]
    m_new = jnp.maximum(m_prev, jnp.max(s, axis=-1, keepdims=True))   # (tq, 1)
    alpha = jnp.exp(m_prev - m_new)
    p = jnp.exp(s - m_new)                                            # (tq, tk)
    l_scr[...] = alpha * l_scr[...] + jnp.sum(p, axis=-1, keepdims=True)
    # (tq, C) = (tq, tk) @ (tk, C) -- natural MXU contraction (v is spatial-major)
    pv = jnp.dot(p.astype(jnp.bfloat16), v_tile, preferred_element_type=jnp.float32)
    acc_scr[...] = alpha * acc_scr[...] + pv
    m_scr[...] = m_new

    @pl.when(ki == nk - 1)
    def _finalize():
        inv_l = 1.0 / l_scr[...]                            # exact; once per q tile
        attn = (acc_scr[...] * inv_l).astype(jnp.bfloat16)  # (tq, C)
        # output 1x1 conv: (tq, C_out) = (tq, C_in) @ (C_in, C_out)   (wp^T prefolded)
        out = jnp.dot(attn, wpt_ref[...],
                      preferred_element_type=jnp.float32) + bp_ref[...]
        out_cm = jnp.transpose(out)                         # (C, tq), once per q tile
        o_ref[0] = (xres_ref[0] + out_cm).astype(o_ref.dtype)


# -----------------------------------------------------------------------------
# Wrapper
# -----------------------------------------------------------------------------
def _pick_tile(t, n):
    """Largest tile <= t that divides n and is a multiple of 128 (else full extent)."""
    t = min(t, n)
    if n % 128 == 0:
        t = (t // 128) * 128
        while t > 0 and (n % t != 0):
            t -= 128
        if t > 0:
            return t
    return n


def _vmem_limit_bytes():
    cap = None
    try:
        info = pltpu.get_tpu_info()
        cap = getattr(info, "vmem_capacity_bytes", None)
    except Exception:
        cap = None
    if not cap:
        cap = 128 * 1024 * 1024
    # leave headroom for compiler-internal scratch; clamp to a sane range.
    return max(32 * 1024 * 1024, min(int(cap * 3 // 4), 112 * 1024 * 1024))


def attn_block(x_nchw, params, *, tq=256, tk=256, thw=512):
    """x_nchw: (B, C, H, W) float32; params: dict of AttnBlock weights."""
    B, C, H, W = x_nchw.shape
    HW = H * W
    G = 32
    assert C % G == 0, "GroupNorm(32, C) requires C % 32 == 0"

    tq = _pick_tile(tq, HW)
    tk = _pick_tile(tk, HW)
    thw = _pick_tile(thw, HW)
    nq, nk, n_hw = HW // tq, HW // tk, HW // thw

    vmem_limit = _vmem_limit_bytes()

    # NCHW -> (B, C, HW): a free reshape, no transpose through HBM.
    x_f = x_nchw.reshape(B, C, HW)

    gsize = C // G
    gmask = (jnp.arange(C)[:, None] // gsize ==
             jnp.arange(G)[None, :]).astype(jnp.float32)    # (C, G) channel->group
    gmask_t = jnp.transpose(gmask)                           # (G, C)

    f32, bf16 = jnp.float32, jnp.bfloat16
    scale_attn = float(C) ** (-0.5)

    gamma = params["gamma"].reshape(C, 1).astype(f32)
    beta = params["beta"].reshape(C, 1).astype(f32)
    wq = params["wq"].reshape(C, C)
    wk_ = params["wk"].reshape(C, C)
    wv_ = params["wv"].reshape(C, C)
    wp_ = params["wp"].reshape(C, C)
    # softmax scale folded into wq/bq; q,v projections fused & pre-transposed.
    wqv_t = jnp.concatenate(
        [jnp.transpose(wq) * scale_attn, jnp.transpose(wv_)], axis=1).astype(bf16)  # (C, 2C)
    bqv = jnp.concatenate(
        [params["bq"] * scale_attn, params["bv"]]).reshape(1, 2 * C).astype(f32)
    wk = wk_.astype(bf16)
    bk = params["bk"].reshape(C, 1).astype(f32)
    wp_t = jnp.transpose(wp_).astype(bf16)                   # (C_in, C_out)
    bp = params["bp"].reshape(1, C).astype(f32)

    # ---------------- kernel 1a: GroupNorm statistics ----------------
    stats_cost = pl.CostEstimate(
        flops=int(4 * B * C * HW),
        transcendentals=0,
        bytes_accessed=int(4 * B * C * HW + 8 * B * C))

    scale_c, shift_c = pl.pallas_call(
        functools.partial(gn_stats_kernel, inv_n=1.0 / float(HW * (C // G))),
        out_shape=(jax.ShapeDtypeStruct((B, C, 1), f32),
                   jax.ShapeDtypeStruct((B, C, 1), f32)),
        grid_spec=pltpu.PrefetchScalarGridSpec(
            num_scalar_prefetch=0,
            grid=(B, n_hw),
            in_specs=[
                pl.BlockSpec((1, C, thw), lambda b, hi: (b, 0, hi)),   # x tile
                pl.BlockSpec((C, G), lambda b, hi: (0, 0)),            # gmask
                pl.BlockSpec((G, C), lambda b, hi: (0, 0)),            # gmask^T
                pl.BlockSpec((C, 1), lambda b, hi: (0, 0)),            # gamma
                pl.BlockSpec((C, 1), lambda b, hi: (0, 0)),            # beta
            ],
            out_specs=(pl.BlockSpec((1, C, 1), lambda b, hi: (b, 0, 0)),
                       pl.BlockSpec((1, C, 1), lambda b, hi: (b, 0, 0))),
            scratch_shapes=[pltpu.VMEM((C, 1), f32), pltpu.VMEM((C, 1), f32)],
        ),
        compiler_params=pltpu.CompilerParams(
            dimension_semantics=("parallel", "arbitrary"),
            vmem_limit_bytes=vmem_limit),
        cost_estimate=stats_cost,
    )(x_f, gmask, gmask_t, gamma, beta)

    # ---------------- kernel 1b: normalize + QKV projections ----------------
    proj_cost = pl.CostEstimate(
        flops=int(6 * B * C * C * HW + 4 * B * C * HW),
        transcendentals=0,
        bytes_accessed=int(4 * B * C * HW + 3 * 2 * B * C * HW + 3 * 2 * C * C))

    q, k, v = pl.pallas_call(
        gn_proj_kernel,
        out_shape=(jax.ShapeDtypeStruct((B, HW, C), bf16),   # q (spatial-major, scaled)
                   jax.ShapeDtypeStruct((B, C, HW), bf16),   # k (channel-major)
                   jax.ShapeDtypeStruct((B, HW, C), bf16)),  # v (spatial-major)
        grid_spec=pltpu.PrefetchScalarGridSpec(
            num_scalar_prefetch=0,
            grid=(B, n_hw),
            in_specs=[
                pl.BlockSpec((1, C, thw), lambda b, hi: (b, 0, hi)),   # x tile
                pl.BlockSpec((1, C, 1), lambda b, hi: (b, 0, 0)),      # scale
                pl.BlockSpec((1, C, 1), lambda b, hi: (b, 0, 0)),      # shift
                pl.BlockSpec((C, 2 * C), lambda b, hi: (0, 0)),        # [wq^T*s | wv^T]
                pl.BlockSpec((1, 2 * C), lambda b, hi: (0, 0)),        # [bq*s | bv]
                pl.BlockSpec((C, C), lambda b, hi: (0, 0)),            # wk
                pl.BlockSpec((C, 1), lambda b, hi: (0, 0)),            # bk
            ],
            out_specs=(pl.BlockSpec((1, thw, C), lambda b, hi: (b, hi, 0)),
                       pl.BlockSpec((1, C, thw), lambda b, hi: (b, 0, hi)),
                       pl.BlockSpec((1, thw, C), lambda b, hi: (b, hi, 0))),
        ),
        compiler_params=pltpu.CompilerParams(
            dimension_semantics=("parallel", "parallel"),
            vmem_limit_bytes=vmem_limit),
        cost_estimate=proj_cost,
    )(x_f, scale_c, shift_c, wqv_t, bqv, wk, bk)

    # ---------------- kernel 2: flash attention + proj + residual ----------------
    # Resident K/V (fetched once per image) when they fit the VMEM budget;
    # otherwise stream (1, C, tk)/(1, tk, C) key tiles per grid step.
    kv_bytes = 2 * (2 * C * HW * 2)                 # K + V, bf16, double-buffered
    tile_bytes = (2 * tq * C * 2                    # q tiles (bf16, double-buffered)
                  + 2 * C * tq * 4 + 2 * C * tq * 4 # x residual + out tiles (f32)
                  + tq * C * 4 + 4 * tq * 4         # acc / m / l scratch
                  + 2 * C * C * 2 + 2 * C * 4)      # wp^T + bp
    kv_resident = (kv_bytes + tile_bytes) <= int(vmem_limit * 0.75)

    if kv_resident:
        k_spec = pl.BlockSpec((1, C, HW), lambda b, qi, ki: (b, 0, 0))
        v_spec = pl.BlockSpec((1, HW, C), lambda b, qi, ki: (b, 0, 0))
        kv_hbm_bytes = B * 2 * 2 * C * HW
    else:
        # TODO(synk): when K/V do not fit VMEM (v7x at very large HW), also raise tq
        # so per-step arithmetic intensity clears the HBM ridge.
        k_spec = pl.BlockSpec((1, C, tk), lambda b, qi, ki: (b, 0, ki))
        v_spec = pl.BlockSpec((1, tk, C), lambda b, qi, ki: (b, ki, 0))
        kv_hbm_bytes = B * nq * 2 * 2 * C * HW

    attn_cost = pl.CostEstimate(
        flops=int(B * (4 * HW * HW * C + 2 * HW * C * C)),
        transcendentals=int(B * HW * HW),
        bytes_accessed=int(kv_hbm_bytes
                           + B * nq * (tq * C * 2 + 2 * C * tq * 4)
                           + 2 * C * C + 4 * C))

    out_f = pl.pallas_call(
        functools.partial(flash_attn_kernel, tk=tk, kv_resident=kv_resident),
        out_shape=jax.ShapeDtypeStruct((B, C, HW), x_nchw.dtype),
        grid_spec=pltpu.PrefetchScalarGridSpec(
            num_scalar_prefetch=0,
            grid=(B, nq, nk),
            in_specs=[
                pl.BlockSpec((1, tq, C), lambda b, qi, ki: (b, qi, 0)),  # q tile
                k_spec,                                                  # k
                v_spec,                                                  # v
                pl.BlockSpec((1, C, tq), lambda b, qi, ki: (b, 0, qi)),  # x (residual)
                pl.BlockSpec((C, C), lambda b, qi, ki: (0, 0)),          # wp^T
                pl.BlockSpec((1, C), lambda b, qi, ki: (0, 0)),          # bp
            ],
            out_specs=pl.BlockSpec((1, C, tq), lambda b, qi, ki: (b, 0, qi)),
            scratch_shapes=[
                pltpu.VMEM((tq, 1), f32),     # running max
                pltpu.VMEM((tq, 1), f32),     # running sum
                pltpu.VMEM((tq, C), f32),     # output accumulator
            ],
        ),
        compiler_params=pltpu.CompilerParams(
            dimension_semantics=("parallel", "parallel", "arbitrary"),
            vmem_limit_bytes=vmem_limit),
        cost_estimate=attn_cost,
    )(q, k, v, x_f, wp_t, bp)

    # (B, C, HW) -> NCHW: free reshape.
    return out_f.reshape(B, C, H, W)


# -----------------------------------------------------------------------------
# Parameter init (matches the PyTorch module's initialize())
# -----------------------------------------------------------------------------
def xavier_uniform(key, c_out, c_in, gain=1.0):
    fan_in, fan_out = c_in, c_out
    a = gain * math.sqrt(6.0 / (fan_in + fan_out))
    return jax.random.uniform(key, (c_out, c_in, 1, 1), jnp.float32, -a, a)


def init_params(key, C):
    k1, k2, k3, k4 = jax.random.split(key, 4)
    return {
        "gamma": jnp.ones((C,), jnp.float32),
        "beta": jnp.zeros((C,), jnp.float32),
        "wq": xavier_uniform(k1, C, C),
        "bq": jnp.zeros((C,), jnp.float32),
        "wk": xavier_uniform(k2, C, C),
        "bk": jnp.zeros((C,), jnp.float32),
        "wv": xavier_uniform(k3, C, C),
        "bv": jnp.zeros((C,), jnp.float32),
        "wp": xavier_uniform(k4, C, C, gain=1e-5),   # proj re-initialized with gain=1e-5
        "bp": jnp.zeros((C,), jnp.float32),
    }


# -----------------------------------------------------------------------------
# Pure-JAX reference (mirrors the PyTorch forward) for a sanity check.
# -----------------------------------------------------------------------------
def reference_attn_block(x, params):
    B, C, H, W = x.shape
    G = 32
    xg = x.reshape(B, G, C // G, H, W)
    mean = xg.mean(axis=(2, 3, 4), keepdims=True)
    var = xg.var(axis=(2, 3, 4), keepdims=True)
    h = ((xg - mean) / jnp.sqrt(var + 1e-5)).reshape(B, C, H, W)
    h = h * params["gamma"].reshape(1, C, 1, 1) + params["beta"].reshape(1, C, 1, 1)
    hw = H * W
    h_t = h.reshape(B, C, hw)

    def conv(wname, bname, z):
        w = params[wname].reshape(C, C)
        return jnp.einsum("oc,bcn->bon", w, z) + params[bname].reshape(1, C, 1)

    q = conv("wq", "bq", h_t)
    k = conv("wk", "bk", h_t)
    v = conv("wv", "bv", h_t)
    w_att = jnp.einsum("bcq,bck->bqk", q, k) * (float(C) ** -0.5)
    w_att = jax.nn.softmax(w_att, axis=-1)
    att = jnp.einsum("bqk,bck->bcq", w_att, v)
    out = conv("wp", "bp", att)
    return x + out.reshape(B, C, H, W)


if __name__ == "__main__":
    key = jax.random.PRNGKey(0)
    kx, kp = jax.random.split(key)

    B, C, H, W = 2, 64, 16, 16     # C must be a multiple of 32 for GroupNorm(32, C)
    x = jax.random.normal(kx, (B, C, H, W), jnp.float32)
    params = init_params(kp, C)

    # thw=tq=tk=128 -> kernel-1 grid (B, 2) and flash grid (B, 2, 2): exercises the
    # GroupNorm stats accumulation, the HW-tiled projections and the online softmax.
    out = attn_block(x, params, tq=128, tk=128, thw=128)
    out = jax.block_until_ready(out)

    assert out.shape == (B, C, H, W)
    assert bool(jnp.all(jnp.isfinite(out)))

    ref = reference_attn_block(x, params)
    max_err = float(jnp.max(jnp.abs(out - ref)))
    assert max_err < 2e-2, f"max abs error vs reference too large: {max_err}"

    print("KERNEL_OK")
</pallas_src>

<mosaic_0001>
module attributes {stable_mosaic.version = 11 : i64} {
  func.func @gn_stats_kernel(%arg0: i32, %arg1: i32, %arg2: memref<1x64x128xf32, #tpu.memory_space<vmem>>, %arg3: memref<64x32xf32, #tpu.memory_space<vmem>>, %arg4: memref<32x64xf32, #tpu.memory_space<vmem>>, %arg5: memref<64x1xf32, #tpu.memory_space<vmem>>, %arg6: memref<64x1xf32, #tpu.memory_space<vmem>>, %arg7: memref<1x64x1xf32, #tpu.memory_space<vmem>>, %arg8: memref<1x64x1xf32, #tpu.memory_space<vmem>>, %arg9: memref<64x1xf32, #tpu.memory_space<vmem>>, %arg10: memref<64x1xf32, #tpu.memory_space<vmem>>) attributes {dimension_semantics = [#tpu.dimension_semantics<parallel>, #tpu.dimension_semantics<arbitrary>], iteration_bounds = array<i64: 2, 2>, scalar_prefetch = 0 : i64, scratch_operands = 2 : i64, tpu.core_type = #tpu.core_type<tc>, window_params = [{transform_indices = @transform_0, window_bounds = array<i64: 1, 64, 128>}, {pipeline_mode = #tpu.pipeline_mode<synchronous>, transform_indices = @transform_1, window_bounds = array<i64: 64, 32>}, {pipeline_mode = #tpu.pipeline_mode<synchronous>, transform_indices = @transform_2, window_bounds = array<i64: 32, 64>}, {pipeline_mode = #tpu.pipeline_mode<synchronous>, transform_indices = @transform_3, window_bounds = array<i64: 64, 1>}, {pipeline_mode = #tpu.pipeline_mode<synchronous>, transform_indices = @transform_4, window_bounds = array<i64: 64, 1>}, {transform_indices = @transform_5, window_bounds = array<i64: 1, 64, 1>}, {transform_indices = @transform_6, window_bounds = array<i64: 1, 64, 1>}]} {
    %c0 = arith.constant 0 : index
    %c0_0 = arith.constant 0 : index
    %c0_1 = arith.constant 0 : index
    %0 = vector.load %arg2[%c0, %c0_0, %c0_1] : memref<1x64x128xf32, #tpu.memory_space<vmem>>, vector<1x64x128xf32>
    %1 = vector.shape_cast %0 : vector<1x64x128xf32> to vector<64x128xf32>
    %c0_i32 = arith.constant 0 : i32
    %2 = arith.cmpi eq, %arg1, %c0_i32 : i32
    %3 = arith.extui %2 : i1 to i32
    %c0_i32_2 = arith.constant 0 : i32
    %4 = arith.cmpi ne, %3, %c0_i32_2 : i32
    scf.if %4 {
      %cst_13 = arith.constant 0.000000e+00 : f32
      %19 = vector.broadcast %cst_13 : f32 to vector<64x1xf32>
      %c0_14 = arith.constant 0 : index
      %c0_15 = arith.constant 0 : index
      %20 = vector.load %arg9[%c0_14, %c0_15] : memref<64x1xf32, #tpu.memory_space<vmem>>, vector<64x1xf32>
      tpu.vector_store %arg9[%c0_14, %c0_15], %19 {strides = array<i32>} : memref<64x1xf32, #tpu.memory_space<vmem>>, vector<64x1xf32>,
      %cst_16 = arith.constant 0.000000e+00 : f32
      %21 = vector.broadcast %cst_16 : f32 to vector<64x1xf32>
      %c0_17 = arith.constant 0 : index
      %c0_18 = arith.constant 0 : index
      %22 = vector.load %arg10[%c0_17, %c0_18] : memref<64x1xf32, #tpu.memory_space<vmem>>, vector<64x1xf32>
      tpu.vector_store %arg10[%c0_17, %c0_18], %21 {strides = array<i32>} : memref<64x1xf32, #tpu.memory_space<vmem>>, vector<64x1xf32>,
    } else {
    }
    %c0_3 = arith.constant 0 : index
    %c0_4 = arith.constant 0 : index
    %5 = vector.load %arg9[%c0_3, %c0_4] : memref<64x1xf32, #tpu.memory_space<vmem>>, vector<64x1xf32>
    %cst = arith.constant dense<0.000000e+00> : vector<64xf32>
    %6 = vector.multi_reduction <add>, %1, %cst [1] : vector<64x128xf32> to vector<64xf32>
    %7 = vector.shape_cast %6 : vector<64xf32> to vector<64x1xf32>
    %8 = arith.addf %5, %7 : vector<64x1xf32>
    %c0_5 = arith.constant 0 : index
    %c0_6 = arith.constant 0 : index
    %9 = vector.load %arg9[%c0_5, %c0_6] : memref<64x1xf32, #tpu.memory_space<vmem>>, vector<64x1xf32>
    tpu.vector_store %arg9[%c0_5, %c0_6], %8 {strides = array<i32>} : memref<64x1xf32, #tpu.memory_space<vmem>>, vector<64x1xf32>,
    %c0_7 = arith.constant 0 : index
    %c0_8 = arith.constant 0 : index
    %10 = vector.load %arg10[%c0_7, %c0_8] : memref<64x1xf32, #tpu.memory_space<vmem>>, vector<64x1xf32>
    %11 = arith.mulf %1, %1 : vector<64x128xf32>
    %cst_9 = arith.constant dense<0.000000e+00> : vector<64xf32>
    %12 = vector.multi_reduction <add>, %11, %cst_9 [1] : vector<64x128xf32> to vector<64xf32>
    %13 = vector.shape_cast %12 : vector<64xf32> to vector<64x1xf32>
    %14 = arith.addf %10, %13 : vector<64x1xf32>
    %c0_10 = arith.constant 0 : index
    %c0_11 = arith.constant 0 : index
    %15 = vector.load %arg10[%c0_10, %c0_11] : memref<64x1xf32, #tpu.memory_space<vmem>>, vector<64x1xf32>
    tpu.vector_store %arg10[%c0_10, %c0_11], %14 {strides = array<i32>} : memref<64x1xf32, #tpu.memory_space<vmem>>, vector<64x1xf32>,
    %c1_i32 = arith.constant 1 : i32
    %16 = arith.cmpi eq, %arg1, %c1_i32 : i32
    %17 = arith.extui %16 : i1 to i32
    %c0_i32_12 = arith.constant 0 : i32
    %18 = arith.cmpi ne, %17, %c0_i32_12 : i32
    scf.if %18 {
      %c0_13 = arith.constant 0 : index
      %c0_14 = arith.constant 0 : index
      %19 = vector.load %arg4[%c0_13, %c0_14] : memref<32x64xf32, #tpu.memory_space<vmem>>, vector<32x64xf32>
      %c0_15 = arith.constant 0 : index
      %c0_16 = arith.constant 0 : index
      %20 = vector.load %arg9[%c0_15, %c0_16] : memref<64x1xf32, #tpu.memory_space<vmem>>, vector<64x1xf32>
      %cst_17 = arith.constant dense<0.000000e+00> : vector<32x1xf32>
      %21 = tpu.matmul %19, %20, %cst_17 {dimension_numbers = #tpu.dot_dimension_numbers<[1], [0], [0], [1], [0, 0, 1, 1], [], []>} : vector<32x64xf32>, vector<64x1xf32>, vector<32x1xf32> -> vector<32x1xf32>
      %c0_18 = arith.constant 0 : index
      %c0_19 = arith.constant 0 : index
      %22 = vector.load %arg4[%c0_18, %c0_19] : memref<32x64xf32, #tpu.memory_space<vmem>>, vector<32x64xf32>
      %c0_20 = arith.constant 0 : index
      %c0_21 = arith.constant 0 : index
      %23 = vector.load %arg10[%c0_20, %c0_21] : memref<64x1xf32, #tpu.memory_space<vmem>>, vector<64x1xf32>
      %cst_22 = arith.constant dense<0.000000e+00> : vector<32x1xf32>
      %24 = tpu.matmul %22, %23, %cst_22 {dimension_numbers = #tpu.dot_dimension_numbers<[1], [0], [0], [1], [0, 0, 1, 1], [], []>} : vector<32x64xf32>, vector<64x1xf32>, vector<32x1xf32> -> vector<32x1xf32>
      %cst_23 = arith.constant 0.001953125 : f32
      %25 = vector.broadcast %cst_23 : f32 to vector<32x1xf32>
      %26 = arith.mulf %21, %25 : vector<32x1xf32>
      %cst_24 = arith.constant 0.001953125 : f32
      %27 = vector.broadcast %cst_24 : f32 to vector<32x1xf32>
      %28 = arith.mulf %24, %27 : vector<32x1xf32>
      %29 = arith.mulf %26, %26 : vector<32x1xf32>
      %30 = arith.subf %28, %29 : vector<32x1xf32>
      %cst_25 = arith.constant 9.99999974E-6 : f32
      %31 = vector.broadcast %cst_25 : f32 to vector<32x1xf32>
      %32 = arith.addf %30, %31 : vector<32x1xf32>
      %33 = math.rsqrt %32 : vector<32x1xf32>
      %c0_26 = arith.constant 0 : index
      %c0_27 = arith.constant 0 : index
      %34 = vector.load %arg3[%c0_26, %c0_27] : memref<64x32xf32, #tpu.memory_space<vmem>>, vector<64x32xf32>
      %cst_28 = arith.constant dense<0.000000e+00> : vector<64x1xf32>
      %35 = tpu.matmul %34, %26, %cst_28 {dimension_numbers = #tpu.dot_dimension_numbers<[1], [0], [0], [1], [0, 0, 1, 1], [], []>} : vector<64x32xf32>, vector<32x1xf32>, vector<64x1xf32> -> vector<64x1xf32>
      %c0_29 = arith.constant 0 : index
      %c0_30 = arith.constant 0 : index
      %36 = vector.load %arg3[%c0_29, %c0_30] : memref<64x32xf32, #tpu.memory_space<vmem>>, vector<64x32xf32>
      %cst_31 = arith.constant dense<0.000000e+00> : vector<64x1xf32>
      %37 = tpu.matmul %36, %33, %cst_31 {dimension_numbers = #tpu.dot_dimension_numbers<[1], [0], [0], [1], [0, 0, 1, 1], [], []>} : vector<64x32xf32>, vector<32x1xf32>, vector<64x1xf32> -> vector<64x1xf32>
      %c0_32 = arith.constant 0 : index
      %c0_33 = arith.constant 0 : index
      %38 = vector.load %arg5[%c0_32, %c0_33] : memref<64x1xf32, #tpu.memory_space<vmem>>, vector<64x1xf32>
      %39 = arith.mulf %38, %37 : vector<64x1xf32>
      %c0_34 = arith.constant 0 : index
      %c0_35 = arith.constant 0 : index
      %c0_36 = arith.constant 0 : index
      %40 = vector.load %arg7[%c0_34, %c0_35, %c0_36] : memref<1x64x1xf32, #tpu.memory_space<vmem>>, vector<1x64x1xf32>
      %41 = vector.shape_cast %40 : vector<1x64x1xf32> to vector<64x1xf32>
      %42 = vector.shape_cast %39 : vector<64x1xf32> to vector<1x64x1xf32>
      tpu.vector_store %arg7[%c0_34, %c0_35, %c0_36], %42 {strides = array<i32>} : memref<1x64x1xf32, #tpu.memory_space<vmem>>, vector<1x64x1xf32>,
      %c0_37 = arith.constant 0 : index
      %c0_38 = arith.constant 0 : index
      %43 = vector.load %arg6[%c0_37, %c0_38] : memref<64x1xf32, #tpu.memory_space<vmem>>, vector<64x1xf32>
      %c0_39 = arith.constant 0 : index
      %c0_40 = arith.constant 0 : index
      %44 = vector.load %arg5[%c0_39, %c0_40] : memref<64x1xf32, #tpu.memory_space<vmem>>, vector<64x1xf32>
      %45 = arith.mulf %44, %37 : vector<64x1xf32>
      %46 = arith.mulf %45, %35 : vector<64x1xf32>
      %47 = arith.subf %43, %46 : vector<64x1xf32>
      %c0_41 = arith.constant 0 : index
      %c0_42 = arith.constant 0 : index
      %c0_43 = arith.constant 0 : index
      %48 = vector.load %arg8[%c0_41, %c0_42, %c0_43] : memref<1x64x1xf32, #tpu.memory_space<vmem>>, vector<1x64x1xf32>
      %49 = vector.shape_cast %48 : vector<1x64x1xf32> to vector<64x1xf32>
      %50 = vector.shape_cast %47 : vector<64x1xf32> to vector<1x64x1xf32>
      tpu.vector_store %arg8[%c0_41, %c0_42, %c0_43], %50 {strides = array<i32>} : memref<1x64x1xf32, #tpu.memory_space<vmem>>, vector<1x64x1xf32>,
    } else {
    }
    return
  }
  func.func @transform_0(%arg0: i32, %arg1: i32) -> (i32, i32, i32) {
    %c0_i32 = arith.constant 0 : i32
    %c0_i32_0 = arith.constant 0 : i32
    return %arg0, %c0_i32, %arg1 : i32, i32, i32
  }
  func.func @transform_1(%arg0: i32, %arg1: i32) -> (i32, i32) {
    %c0_i32 = arith.constant 0 : i32
    %c0_i32_0 = arith.constant 0 : i32
    %c0_i32_1 = arith.constant 0 : i32
    return %c0_i32, %c0_i32_0 : i32, i32
  }
  func.func @transform_2(%arg0: i32, %arg1: i32) -> (i32, i32) {
    %c0_i32 = arith.constant 0 : i32
    %c0_i32_0 = arith.constant 0 : i32
    %c0_i32_1 = arith.constant 0 : i32
    return %c0_i32, %c0_i32_0 : i32, i32
  }
  func.func @transform_3(%arg0: i32, %arg1: i32) -> (i32, i32) {
    %c0_i32 = arith.constant 0 : i32
    %c0_i32_0 = arith.constant 0 : i32
    %c0_i32_1 = arith.constant 0 : i32
    return %c0_i32, %c0_i32_0 : i32, i32
  }
  func.func @transform_4(%arg0: i32, %arg1: i32) -> (i32, i32) {
    %c0_i32 = arith.constant 0 : i32
    %c0_i32_0 = arith.constant 0 : i32
    %c0_i32_1 = arith.constant 0 : i32
    return %c0_i32, %c0_i32_0 : i32, i32
  }
  func.func @transform_5(%arg0: i32, %arg1: i32) -> (i32, i32, i32) {
    %c0_i32 = arith.constant 0 : i32
    %c0_i32_0 = arith.constant 0 : i32
    %c0_i32_1 = arith.constant 0 : i32
    return %arg0, %c0_i32, %c0_i32_0 : i32, i32, i32
  }
  func.func @transform_6(%arg0: i32, %arg1: i32) -> (i32, i32, i32) {
    %c0_i32 = arith.constant 0 : i32
    %c0_i32_0 = arith.constant 0 : i32
    %c0_i32_1 = arith.constant 0 : i32
    return %arg0, %c0_i32, %c0_i32_0 : i32, i32, i32
  }
}

</mosaic_0001>

<llo_original>
// kernel: tpu_custom_call.1
$region0: #{tpu_custom_call.1}
  #allocation0 [shape = 'u32[]', space=smem, size = 0x4, offset = 0x4, fixed_abs, tag = 'smem constant byte address 0x4 - core index']
  #allocation1 [shape = 'u32[144,128]{1,0:T(1,128)}', space=vmem, size = 0x12000, scoped, tag = 'internal scratch']
  #allocation2 [shape = 'f32[64,1]{1,0:T(8,128)}', space=vmem, size = 0x8000, scoped, tag = 'scratch operand']
  #allocation3 [shape = 'f32[64,1]{1,0:T(8,128)}', space=vmem, size = 0x8000, scoped, tag = 'scratch operand']
  %s0 = inlined_call_operand.hbm [shape: f32[2,64,256], index: 0, kind: input, shape index: {}]
  %s1 = inlined_call_operand.hbm [shape: f32[64,32], index: 1, kind: input, shape index: {}]
  %s2 = inlined_call_operand.hbm [shape: f32[32,64], index: 2, kind: input, shape index: {}]
  %s3 = inlined_call_operand.hbm [shape: f32[64,1], index: 3, kind: input, shape index: {}]
  %s4 = inlined_call_operand.hbm [shape: f32[64,1], index: 4, kind: input, shape index: {}]
  %s5 = inlined_call_operand.hbm [shape: f32[2,64,1], index: 5, kind: output, shape index: {0}]
  %s6 = inlined_call_operand.hbm [shape: f32[2,64,1], index: 6, kind: output, shape index: {1}]
  %7 = xla_tuple %s5, %s6
  %s8 = sld [smem:[#allocation0]]
  $region89: #{tpu_custom_call.1} parent=0
    _
  %s10 = ssub.s32 1, %s8
  %s11 = scalar_select 0, %s10, %s8
  $region1: #{tpu_custom_call.1} parent=0
    #allocation4 [shape = 'u8[65536]{0}', space=vmem, size = 0x10000, scoped, tag = 'input window, operand 0']
    #allocation5 [shape = 's32[2]{0}', space=sflag, size = 0x8, scoped, tag = 'scoped memory for tpu_custom_call.1']
    #allocation6 [shape = 's32[2]{0}', space=sflag, size = 0x8, scoped, tag = 'scoped memory for tpu_custom_call.1']
    #allocation7 [shape = 'u8[32768]{0}', space=vmem, size = 0x8000, scoped, tag = 'input window, operand 1, single buffered']
    #allocation8 [shape = 's32[1]{0}', space=sflag, size = 0x4, scoped, tag = 'scoped memory for tpu_custom_call.1']
    #allocation9 [shape = 'u8[16384]{0}', space=vmem, size = 0x4000, scoped, tag = 'input window, operand 2, single buffered']
    #allocation10 [shape = 'u8[32768]{0}', space=vmem, size = 0x8000, scoped, tag = 'input window, operand 3, single buffered']
    #allocation11 [shape = 's32[1]{0}', space=sflag, size = 0x4, scoped, tag = 'scoped memory for tpu_custom_call.1']
    #allocation12 [shape = 'u8[32768]{0}', space=vmem, size = 0x8000, scoped, tag = 'input window, operand 4, single buffered']
    #allocation13 [shape = 'u8[65536]{0}', space=vmem, size = 0x10000, scoped, tag = 'output window, operand 0']
    #allocation14 [shape = 'u8[65536]{0}', space=vmem, size = 0x10000, scoped, tag = 'output window, operand 1']
    #allocation15 [shape = 's32[2]{0}', space=sflag, size = 0x8, scoped, tag = 'scoped memory for tpu_custom_call.1']
    %12 = vsyncpa [#allocation5], 0
    %s13 = scalar_lea.sflag [#allocation5], 1
    %14 = vsyncpa %s13, 0
    %15 = vsyncpa [#allocation8], 0
    %16 = vsyncpa [#allocation11], 0
    %17 = vsyncpa [#allocation6], 0
    %s18 = scalar_lea.sflag [#allocation6], 1
    %19 = vsyncpa %s18, 0
    %20 = vsyncpa [#allocation15], 0
    %s21 = scalar_lea.sflag [#allocation15], 1
    %22 = vsyncpa %s21, 0
    loop: start=0, step=1, limit=6
    $region2: #{tpu_custom_call.1} parent=1 // loop_pre_header
      _
    $region3: #{tpu_custom_call.1} parent=1 // loop_header
      %s24 = sphi 0, %s28
      %p25 = scmp.ge.s32.totalorder %s24, 6
      %s31 = sphi 0, %s43
      %s32 = sphi 0, %s39
      %s33 = sphi 0, %s31
      %s34 = sphi 0, %s32
      %s35 = sphi 0, %s33
      %s36 = sphi 0, %s34
      %s48 = sphi 0, %s50
      %s51 = sphi 0, %s48
      %s52 = sphi 0, %s51
      %s68 = sphi 0, %s52
      %s72 = sphi 0, %s72
      %s74 = sphi 0, %s72
      %s75 = sphi 0, %s74
      %s89 = sphi 0, %s75
      %s93 = sphi 0, %s93
      %s95 = sphi 0, %s93
      %s96 = sphi 0, %s95
      %s110 = sphi 0, %s96
      %s114 = sphi 0, %s114
      %s116 = sphi 0, %s114
      %s117 = sphi 0, %s116
      %s131 = sphi 0, %s117
      %s135 = sphi 0, %s135
      %s137 = sphi 0, %s135
      %s138 = sphi 0, %s137
      %s152 = sphi 0, %s138
      %s158 = sphi 0, %s160
      %s161 = sphi 0, %s158
      %s162 = sphi 0, %s161
      %s178 = sphi 0, %s162
      %s184 = sphi 0, %s186
      %s187 = sphi 0, %s184
      %s188 = sphi 0, %s187
      %s204 = sphi 0, %s188
    $region4: #{tpu_custom_call.1} parent=1 // loop_header_branch
      %27 = sbr.rel (%p25) target = $region8
    $region5: #{tpu_custom_call.1} parent=1 // loop_body
      %s29 = ssub.s32 %s24, 1
      %s30 = ssub.s32 %s24, 2
      %s37 = sadd.s32 1, %s32
      %p38 = scmp.ge.s32.totalorder %s37, 2
      %s39 = scalar_select %p38, 0, %s37
      %s40 = sadd.s32 1, %s31
      %s41 = scalar_select %p38, %s40, %s31
      %p42 = scmp.ge.s32.totalorder %s41, 2
      %s43 = scalar_select %p42, 0, %s41
      %s44 = ssub.s32 %s31, %s43
      %s45 = ssub.s32 %s32, %s39
      %s46 = sor.u32 %s44, %s45
      %p47 = scmp.eq.s32.totalorder %s46, 0
      %s49 = sadd.s32 %s48, 1
      %s50 = scalar_select %p47, %s48, %s49
      %p53 = pneg %p47
      %p54 = scmp.eq.s32.totalorder %s24, 3
      %p55 = por %p53, %p54
      %p56 = scmp.ne.s32.totalorder %s48, %s51
      %p57 = scmp.eq.s32.totalorder %s24, 0
      %p58 = por %p56, %p57
      %p59 = scmp.ne.s32.totalorder %s48, %s51
      %p60 = scmp.eq.s32.totalorder %s29, 3
      %p61 = por %p59, %p60
      %p62 = scmp.ne.s32.totalorder %s51, %s52
      %p63 = scmp.eq.s32.totalorder %s29, 0
      %p64 = por %p62, %p63
      %p65 = scmp.ne.s32.totalorder %s51, %s52
      %p66 = scmp.eq.s32.totalorder %s30, 3
      %p67 = por %p65, %p66
      %p69 = scmp.ne.s32.totalorder %s52, %s68
      %p70 = scmp.eq.s32.totalorder %s30, 0
      %p71 = por %p69, %p70
      %s73 = sadd.s32 %s72, 1
      %p76 = scmp.eq.s32.totalorder %s24, 3
      %p77 = scmp.ne.s32.totalorder %s72, %s74
      %p78 = scmp.eq.s32.totalorder %s24, 0
      %p79 = por %p77, %p78
      %p80 = scmp.ne.s32.totalorder %s72, %s74
      %p81 = scmp.eq.s32.totalorder %s29, 3
      %p82 = por %p80, %p81
      %p83 = scmp.ne.s32.totalorder %s74, %s75
      %p84 = scmp.eq.s32.totalorder %s29, 0
      %p85 = por %p83, %p84
      %p86 = scmp.ne.s32.totalorder %s74, %s75
      %p87 = scmp.eq.s32.totalorder %s30, 3
      %p88 = por %p86, %p87
      %p90 = scmp.ne.s32.totalorder %s75, %s89
      %p91 = scmp.eq.s32.totalorder %s30, 0
      %p92 = por %p90, %p91
      %s94 = sadd.s32 %s93, 1
      %p97 = scmp.eq.s32.totalorder %s24, 3
      %p98 = scmp.ne.s32.totalorder %s93, %s95
      %p99 = scmp.eq.s32.totalorder %s24, 0
      %p100 = por %p98, %p99
      %p101 = scmp.ne.s32.totalorder %s93, %s95
      %p102 = scmp.eq.s32.totalorder %s29, 3
      %p103 = por %p101, %p102
      %p104 = scmp.ne.s32.totalorder %s95, %s96
      %p105 = scmp.eq.s32.totalorder %s29, 0
      %p106 = por %p104, %p105
      %p107 = scmp.ne.s32.totalorder %s95, %s96
      %p108 = scmp.eq.s32.totalorder %s30, 3
      %p109 = por %p107, %p108
      %p111 = scmp.ne.s32.totalorder %s96, %s110
      %p112 = scmp.eq.s32.totalorder %s30, 0
      %p113 = por %p111, %p112
      %s115 = sadd.s32 %s114, 1
      %p118 = scmp.eq.s32.totalorder %s24, 3
      %p119 = scmp.ne.s32.totalorder %s114, %s116
      %p120 = scmp.eq.s32.totalorder %s24, 0
      %p121 = por %p119, %p120
      %p122 = scmp.ne.s32.totalorder %s114, %s116
      %p123 = scmp.eq.s32.totalorder %s29, 3
      %p124 = por %p122, %p123
      %p125 = scmp.ne.s32.totalorder %s116, %s117
      %p126 = scmp.eq.s32.totalorder %s29, 0
      %p127 = por %p125, %p126
      %p128 = scmp.ne.s32.totalorder %s116, %s117
      %p129 = scmp.eq.s32.totalorder %s30, 3
      %p130 = por %p128, %p129
      %p132 = scmp.ne.s32.totalorder %s117, %s131
      %p133 = scmp.eq.s32.totalorder %s30, 0
      %p134 = por %p132, %p133
      %s136 = sadd.s32 %s135, 1
      %p139 = scmp.eq.s32.totalorder %s24, 3
      %p140 = scmp.ne.s32.totalorder %s135, %s137
      %p141 = scmp.eq.s32.totalorder %s24, 0
      %p142 = por %p140, %p141
      %p143 = scmp.ne.s32.totalorder %s135, %s137
      %p144 = scmp.eq.s32.totalorder %s29, 3
      %p145 = por %p143, %p144
      %p146 = scmp.ne.s32.totalorder %s137, %s138
      %p147 = scmp.eq.s32.totalorder %s29, 0
      %p148 = por %p146, %p147
      %p149 = scmp.ne.s32.totalorder %s137, %s138
      %p150 = scmp.eq.s32.totalorder %s30, 3
      %p151 = por %p149, %p150
      %p153 = scmp.ne.s32.totalorder %s138, %s152
      %p154 = scmp.eq.s32.totalorder %s30, 0
      %p155 = por %p153, %p154
      %s156 = ssub.s32 %s31, %s43
      %p157 = scmp.eq.s32.totalorder %s156, 0
      %s159 = sadd.s32 %s158, 1
      %s160 = scalar_select %p157, %s158, %s159
      %p163 = pneg %p157
      %p164 = scmp.eq.s32.totalorder %s24, 3
      %p165 = por %p163, %p164
      %p166 = scmp.ne.s32.totalorder %s158, %s161
      %p167 = scmp.eq.s32.totalorder %s24, 0
      %p168 = por %p166, %p167
      %p169 = scmp.ne.s32.totalorder %s158, %s161
      %p170 = scmp.eq.s32.totalorder %s29, 3
      %p171 = por %p169, %p170
      %p172 = scmp.ne.s32.totalorder %s161, %s162
      %p173 = scmp.eq.s32.totalorder %s29, 0
      %p174 = por %p172, %p173
      %p175 = scmp.ne.s32.totalorder %s161, %s162
      %p176 = scmp.eq.s32.totalorder %s30, 3
      %p177 = por %p175, %p176
      %p179 = scmp.ne.s32.totalorder %s162, %s178
      %p180 = scmp.eq.s32.totalorder %s30, 0
      %p181 = por %p179, %p180
      %s182 = ssub.s32 %s31, %s43
      %p183 = scmp.eq.s32.totalorder %s182, 0
      %s185 = sadd.s32 %s184, 1
      %s186 = scalar_select %p183, %s184, %s185
      %p189 = pneg %p183
      %p190 = scmp.eq.s32.totalorder %s24, 3
      %p191 = por %p189, %p190
      %p192 = scmp.ne.s32.totalorder %s184, %s187
      %p193 = scmp.eq.s32.totalorder %s24, 0
      %p194 = por %p192, %p193
      %p195 = scmp.ne.s32.totalorder %s184, %s187
      %p196 = scmp.eq.s32.totalorder %s29, 3
      %p197 = por %p195, %p196
      %p198 = scmp.ne.s32.totalorder %s187, %s188
      %p199 = scmp.eq.s32.totalorder %s29, 0
      %p200 = por %p198, %p199
      %p201 = scmp.ne.s32.totalorder %s187, %s188
      %p202 = scmp.eq.s32.totalorder %s30, 3
      %p203 = por %p201, %p202
      %p205 = scmp.ne.s32.totalorder %s188, %s204
      %p206 = scmp.eq.s32.totalorder %s30, 0
      %p207 = por %p205, %p206
      %p208 = scmp.le.s32.totalorder 1, %s24
      %p209 = scmp.lt.s32.totalorder %s24, 5
      %p210 = pnand %p208, %p209
      %p211 = pneg %p210
      // Predicated region
      $region9: #{tpu_custom_call.1} parent=5 // pred_check
        _
      $region10: #{tpu_custom_call.1} parent=5 // pred_check_branch
        %213 = sbr.rel (%p210) target = $region12
      $region11: #{tpu_custom_call.1} parent=5 // pred_region
        %s214 = ssub.s32 %s24, 1
        // Predicated region
        $region13: #{tpu_custom_call.1} parent=11 // pred_check
          %p215 = pneg %p85
        $region14: #{tpu_custom_call.1} parent=11 // pred_check_branch
          %217 = sbr.rel (%p215) target = $region16
        $region15: #{tpu_custom_call.1} parent=11 // pred_region
          %s219 = ssub.s32 1024, 1024
          %220 = vsyncadd [#allocation8], %s219
          %s221 = sshll.u32 [#allocation7], 4
          %s222 = int_to_ptr.vmem [resolvable:$true] %s221
          %227 = dma.hbm_to_vmem [thread:$0]  %s1, 1024, %s222, [#allocation8], 128, 128, 8
        $region16: #{tpu_custom_call.1} parent=11 // pred_fallthru
          _
        // Predicated region
        $region17: #{tpu_custom_call.1} parent=11 // pred_check
          %p228 = pneg %p106
        $region18: #{tpu_custom_call.1} parent=11 // pred_check_branch
          %230 = sbr.rel (%p228) target = $region20
        $region19: #{tpu_custom_call.1} parent=11 // pred_region
          %s232 = ssub.s32 512, 512
          %233 = vsyncadd [#allocation8], %s232
          %s234 = sshll.u32 [#allocation9], 4
          %s235 = int_to_ptr.vmem [resolvable:$true] %s234
          %240 = dma.hbm_to_vmem [thread:$0]  %s2, 512, %s235, [#allocation8], 128, 128, 8
        $region20: #{tpu_custom_call.1} parent=11 // pred_fallthru
          _
        // Predicated region
        $region21: #{tpu_custom_call.1} parent=11 // pred_check
          %p241 = pneg %p127
        $region22: #{tpu_custom_call.1} parent=11 // pred_check_branch
          %243 = sbr.rel (%p241) target = $region24
        $region23: #{tpu_custom_call.1} parent=11 // pred_region
          %s245 = ssub.s32 1024, 1024
          %246 = vsyncadd [#allocation11], %s245
          %s247 = sshll.u32 [#allocation10], 4
          %s248 = int_to_ptr.vmem [resolvable:$true] %s247
          %253 = dma.hbm_to_vmem [thread:$0]  %s3, 1024, %s248, [#allocation11], 128, 128, 8
        $region24: #{tpu_custom_call.1} parent=11 // pred_fallthru
          _
        // Predicated region
        $region25: #{tpu_custom_call.1} parent=11 // pred_check
          %p254 = pneg %p148
        $region26: #{tpu_custom_call.1} parent=11 // pred_check_branch
          %256 = sbr.rel (%p254) target = $region28
        $region27: #{tpu_custom_call.1} parent=11 // pred_region
          %s258 = ssub.s32 1024, 1024
          %259 = vsyncadd [#allocation11], %s258
          %s260 = sshll.u32 [#allocation12], 4
          %s261 = int_to_ptr.vmem [resolvable:$true] %s260
          %266 = dma.hbm_to_vmem [thread:$0]  %s4, 1024, %s261, [#allocation11], 128, 128, 8
        $region28: #{tpu_custom_call.1} parent=11 // pred_fallthru
          _
      $region12: #{tpu_custom_call.1} parent=5 // pred_fallthru
        _
      %p267 = scmp.lt.s32.totalorder %s24, 4
      // Predicated region
      $region29: #{tpu_custom_call.1} parent=5 // pred_check
        %p268 = pneg %p267
      $region30: #{tpu_custom_call.1} parent=5 // pred_check_branch
        %270 = sbr.rel (%p268) target = $region32
      $region31: #{tpu_custom_call.1} parent=5 // pred_region
        // Predicated region
        $region33: #{tpu_custom_call.1} parent=31 // pred_check
          %p271 = pneg %p58
        $region34: #{tpu_custom_call.1} parent=31 // pred_check_branch
          %273 = sbr.rel (%p271) target = $region36
        $region35: #{tpu_custom_call.1} parent=31 // pred_region
          %s274 = sand.u32 %s48, 1
          %s275 = scalar_lea.sflag [#allocation5], %s274
          %s276 = sand.u32 %s48, 1
          %s277 = smul.addr %s276, 64
          %s278 = scalar_lea.vmem [#allocation4], %s277
          %s280 = ssub.s32 1024, 1024
          %281 = vsyncadd %s275, %s280
          %s282 = smul.addr %s31, 16
          %s283 = sadd.s32 %s32, %s282
          %s284 = smul.addr %s283, 128
          %s285 = scalar_lea.hbm %s0, %s284
          %s286 = sshll.u32 %s278, 4
          %s287 = int_to_ptr.vmem [resolvable:$true] %s286
          %292 = dma.hbm_to_vmem [thread:$0]  %s285, 1024, %s287, %s275, 256, 128, 8
        $region36: #{tpu_custom_call.1} parent=31 // pred_fallthru
          _
      $region32: #{tpu_custom_call.1} parent=5 // pred_fallthru
        _
      %p293 = scmp.le.s32.totalorder 1, %s24
      %p294 = scmp.lt.s32.totalorder %s24, 5
      %p295 = pnand %p293, %p294
      %p296 = pneg %p295
      // Predicated region
      $region37: #{tpu_custom_call.1} parent=5 // pred_check
        _
      $region38: #{tpu_custom_call.1} parent=5 // pred_check_branch
        %298 = sbr.rel (%p295) target = $region40
      $region39: #{tpu_custom_call.1} parent=5 // pred_region
        %s299 = ssub.s32 %s24, 1
        %s300 = sand.u32 %s51, 1
        %s301 = scalar_lea.sflag [#allocation5], %s300
        %s302 = sand.u32 %s51, 1
        %s303 = smul.addr %s302, 64
        %s304 = scalar_lea.vmem [#allocation4], %s303
        // Predicated region
        $region41: #{tpu_custom_call.1} parent=39 // pred_check
          %p305 = pneg %p64
        $region42: #{tpu_custom_call.1} parent=39 // pred_check_branch
          %307 = sbr.rel (%p305) target = $region44
        $region43: #{tpu_custom_call.1} parent=39 // pred_region
          %308 = dma.done %s301, 1024
        $region44: #{tpu_custom_call.1} parent=39 // pred_fallthru
          _
        // Predicated region
        $region45: #{tpu_custom_call.1} parent=39 // pred_check
          %p309 = pneg %p85
        $region46: #{tpu_custom_call.1} parent=39 // pred_check_branch
          %311 = sbr.rel (%p309) target = $region48
        $region47: #{tpu_custom_call.1} parent=39 // pred_region
          %312 = dma.done [#allocation8], 1024
        $region48: #{tpu_custom_call.1} parent=39 // pred_fallthru
          _
        // Predicated region
        $region49: #{tpu_custom_call.1} parent=39 // pred_check
          %p313 = pneg %p106
        $region50: #{tpu_custom_call.1} parent=39 // pred_check_branch
          %315 = sbr.rel (%p313) target = $region52
        $region51: #{tpu_custom_call.1} parent=39 // pred_region
          %316 = dma.done [#allocation8], 512
        $region52: #{tpu_custom_call.1} parent=39 // pred_fallthru
          _
        // Predicated region
        $region53: #{tpu_custom_call.1} parent=39 // pred_check
          %p317 = pneg %p127
        $region54: #{tpu_custom_call.1} parent=39 // pred_check_branch
          %319 = sbr.rel (%p317) target = $region56
        $region55: #{tpu_custom_call.1} parent=39 // pred_region
          %320 = dma.done [#allocation11], 1024
        $region56: #{tpu_custom_call.1} parent=39 // pred_fallthru
          _
        // Predicated region
        $region57: #{tpu_custom_call.1} parent=39 // pred_check
          %p321 = pneg %p148
        $region58: #{tpu_custom_call.1} parent=39 // pred_check_branch
          %323 = sbr.rel (%p321) target = $region60
        $region59: #{tpu_custom_call.1} parent=39 // pred_region
          %324 = dma.done [#allocation11], 1024
        $region60: #{tpu_custom_call.1} parent=39 // pred_fallthru
          _
        %s325 = sand.u32 %s51, 1
        %s326 = scalar_lea.sflag [#allocation5], %s325
        %s327 = sand.u32 %s51, 1
        %s328 = smul.addr %s327, 64
        %s329 = scalar_lea.vmem [#allocation4], %s328
        %p330 = pneg %p64
        %p331 = pneg %p61
        %p332 = pneg %p85
        %p333 = pneg %p82
        %p334 = pneg %p106
        %p335 = pneg %p103
        %p336 = pneg %p127
        %p337 = pneg %p124
        %p338 = pneg %p148
        %p339 = pneg %p145
        %p340 = pneg %p174
        %p341 = pneg %p171
        %s342 = sand.u32 %s161, 1
        %s343 = scalar_lea.sflag [#allocation6], %s342
        %s344 = sand.u32 %s161, 1
        %s345 = smul.addr %s344, 64
        %s346 = scalar_lea.vmem [#allocation13], %s345
        %p347 = pneg %p200
        %p348 = pneg %p197
        %s349 = sand.u32 %s187, 1
        %s350 = scalar_lea.sflag [#allocation15], %s349
        %s351 = sand.u32 %s187, 1
        %s352 = smul.addr %s351, 64
        %s353 = scalar_lea.vmem [#allocation14], %s352
        %v354 = vld [vmem:[%s304] sm:$0xff]
        %v355 = vld [vmem:[%s304 + $0x8] sm:$0xff]
        %v356 = vld [vmem:[%s304 + $0x10] sm:$0xff]
        %v357 = vld [vmem:[%s304 + $0x18] sm:$0xff]
        %v358 = vld [vmem:[%s304 + $0x20] sm:$0xff]
        %v359 = vld [vmem:[%s304 + $0x28] sm:$0xff]
        %v360 = vld [vmem:[%s304 + $0x30] sm:$0xff]
        %v361 = vld [vmem:[%s304 + $0x38] sm:$0xff]
        %p362 = scmp.eq.s32.totalorder %s34, 0
        // Predicated region
        $region61: #{tpu_custom_call.1} parent=39 // pred_check
          %p363 = pneg %p362
        $region62: #{tpu_custom_call.1} parent=39 // pred_check_branch
          %365 = sbr.rel (%p363) target = $region64
        $region63: #{tpu_custom_call.1} parent=39 // pred_region
          %vm366 = vcmask 7168
          %367 = vst.msk [vmem:[#allocation2] sm:$0xff] %vm366, 0.0
          %368 = vst.msk [vmem:[#allocation2 + $0x8] sm:$0xff] %vm366, 0.0
          %369 = vst.msk [vmem:[#allocation2 + $0x10] sm:$0xff] %vm366, 0.0
          %370 = vst.msk [vmem:[#allocation2 + $0x18] sm:$0xff] %vm366, 0.0
          %371 = vst.msk [vmem:[#allocation2 + $0x20] sm:$0xff] %vm366, 0.0
          %372 = vst.msk [vmem:[#allocation2 + $0x28] sm:$0xff] %vm366, 0.0
          %373 = vst.msk [vmem:[#allocation2 + $0x30] sm:$0xff] %vm366, 0.0
          %374 = vst.msk [vmem:[#allocation2 + $0x38] sm:$0xff] %vm366, 0.0
          %375 = vst.msk [vmem:[#allocation3] sm:$0xff] %vm366, 0.0
          %376 = vst.msk [vmem:[#allocation3 + $0x8] sm:$0xff] %vm366, 0.0
          %377 = vst.msk [vmem:[#allocation3 + $0x10] sm:$0xff] %vm366, 0.0
          %378 = vst.msk [vmem:[#allocation3 + $0x18] sm:$0xff] %vm366, 0.0
          %379 = vst.msk [vmem:[#allocation3 + $0x20] sm:$0xff] %vm366, 0.0
          %380 = vst.msk [vmem:[#allocation3 + $0x28] sm:$0xff] %vm366, 0.0
          %381 = vst.msk [vmem:[#allocation3 + $0x30] sm:$0xff] %vm366, 0.0
          %382 = vst.msk [vmem:[#allocation3 + $0x38] sm:$0xff] %vm366, 0.0
        $region64: #{tpu_custom_call.1} parent=39 // pred_fallthru
          _
        %v383 = vld [vmem:[#allocation2] sm:$0xff]
        %v384 = vld [vmem:[#allocation2 + $0x8] sm:$0xff]
        %v385 = vld [vmem:[#allocation2 + $0x10] sm:$0xff]
        %v386 = vld [vmem:[#allocation2 + $0x18] sm:$0xff]
        %v387 = vld [vmem:[#allocation2 + $0x20] sm:$0xff]
        %v388 = vld [vmem:[#allocation2 + $0x28] sm:$0xff]
        %v389 = vld [vmem:[#allocation2 + $0x30] sm:$0xff]
        %v390 = vld [vmem:[#allocation2 + $0x38] sm:$0xff]
        %391 = vadd.xlane.f32.xlu0 %v354
        %v392 = vpop.xlane.xlu0 %391
        %393 = vadd.xlane.f32.xlu0 %v355
        %v394 = vpop.xlane.xlu0 %393
        %395 = vadd.xlane.f32.xlu0 %v356
        %v396 = vpop.xlane.xlu0 %395
        %397 = vadd.xlane.f32.xlu0 %v357
        %v398 = vpop.xlane.xlu0 %397
        %399 = vadd.xlane.f32.xlu0 %v358
        %v400 = vpop.xlane.xlu0 %399
        %401 = vadd.xlane.f32.xlu0 %v359
        %v402 = vpop.xlane.xlu0 %401
        %403 = vadd.xlane.f32.xlu0 %v360
        %v404 = vpop.xlane.xlu0 %403
        %405 = vadd.xlane.f32.xlu0 %v361
        %v406 = vpop.xlane.xlu0 %405
        %v407 = vadd.f32 %v383, %v392
        %v408 = vadd.f32 %v384, %v394
        %v409 = vadd.f32 %v385, %v396
        %v410 = vadd.f32 %v386, %v398
        %v411 = vadd.f32 %v387, %v400
        %v412 = vadd.f32 %v388, %v402
        %v413 = vadd.f32 %v389, %v404
        %v414 = vadd.f32 %v390, %v406
        %vm415 = vcmask 7168
        %416 = vst.msk [vmem:[#allocation2] sm:$0xff] %vm415, %v407
        %417 = vst.msk [vmem:[#allocation2 + $0x8] sm:$0xff] %vm415, %v408
        %418 = vst.msk [vmem:[#allocation2 + $0x10] sm:$0xff] %vm415, %v409
        %419 = vst.msk [vmem:[#allocation2 + $0x18] sm:$0xff] %vm415, %v410
        %420 = vst.msk [vmem:[#allocation2 + $0x20] sm:$0xff] %vm415, %v411
        %421 = vst.msk [vmem:[#allocation2 + $0x28] sm:$0xff] %vm415, %v412
        %422 = vst.msk [vmem:[#allocation2 + $0x30] sm:$0xff] %vm415, %v413
        %423 = vst.msk [vmem:[#allocation2 + $0x38] sm:$0xff] %vm415, %v414
        %v424 = vld [vmem:[#allocation3] sm:$0xff]
        %v425 = vld [vmem:[#allocation3 + $0x8] sm:$0xff]
        %v426 = vld [vmem:[#allocation3 + $0x10] sm:$0xff]
        %v427 = vld [vmem:[#allocation3 + $0x18] sm:$0xff]
        %v428 = vld [vmem:[#allocation3 + $0x20] sm:$0xff]
        %v429 = vld [vmem:[#allocation3 + $0x28] sm:$0xff]
        %v430 = vld [vmem:[#allocation3 + $0x30] sm:$0xff]
        %v431 = vld [vmem:[#allocation3 + $0x38] sm:$0xff]
        %v432 = vmul.f32 %v354, %v354
        %v433 = vmul.f32 %v355, %v355
        %v434 = vmul.f32 %v356, %v356
        %v435 = vmul.f32 %v357, %v357
        %v436 = vmul.f32 %v358, %v358
        %v437 = vmul.f32 %v359, %v359
        %v438 = vmul.f32 %v360, %v360
        %v439 = vmul.f32 %v361, %v361
        %440 = vadd.xlane.f32.xlu0 %v432
        %v441 = vpop.xlane.xlu0 %440
        %442 = vadd.xlane.f32.xlu0 %v433
        %v443 = vpop.xlane.xlu0 %442
        %444 = vadd.xlane.f32.xlu0 %v434
        %v445 = vpop.xlane.xlu0 %444
        %446 = vadd.xlane.f32.xlu0 %v435
        %v447 = vpop.xlane.xlu0 %446
        %448 = vadd.xlane.f32.xlu0 %v436
        %v449 = vpop.xlane.xlu0 %448
        %450 = vadd.xlane.f32.xlu0 %v437
        %v451 = vpop.xlane.xlu0 %450
        %452 = vadd.xlane.f32.xlu0 %v438
        %v453 = vpop.xlane.xlu0 %452
        %454 = vadd.xlane.f32.xlu0 %v439
        %v455 = vpop.xlane.xlu0 %454
        %v456 = vadd.f32 %v424, %v441
        %v457 = vadd.f32 %v425, %v443
        %v458 = vadd.f32 %v426, %v445
        %v459 = vadd.f32 %v427, %v447
        %v460 = vadd.f32 %v428, %v449
        %v461 = vadd.f32 %v429, %v451
        %v462 = vadd.f32 %v430, %v453
        %v463 = vadd.f32 %v431, %v455
        %464 = vst.msk [vmem:[#allocation3] sm:$0xff] %vm415, %v456
        %465 = vst.msk [vmem:[#allocation3 + $0x8] sm:$0xff] %vm415, %v457
        %466 = vst.msk [vmem:[#allocation3 + $0x10] sm:$0xff] %vm415, %v458
        %467 = vst.msk [vmem:[#allocation3 + $0x18] sm:$0xff] %vm415, %v459
        %468 = vst.msk [vmem:[#allocation3 + $0x20] sm:$0xff] %vm415, %v460
        %469 = vst.msk [vmem:[#allocation3 + $0x28] sm:$0xff] %vm415, %v461
        %470 = vst.msk [vmem:[#allocation3 + $0x30] sm:$0xff] %vm415, %v462
        %471 = vst.msk [vmem:[#allocation3 + $0x38] sm:$0xff] %vm415, %v463
        %p472 = scmp.eq.s32.totalorder %s34, 1
        // Predicated region
        $region65: #{tpu_custom_call.1} parent=39 // pred_check
          %p473 = pneg %p472
        $region66: #{tpu_custom_call.1} parent=39 // pred_check_branch
          %475 = sbr.rel (%p473) target = $region68
        $region67: #{tpu_custom_call.1} parent=39 // pred_region
          %v476 = vld [vmem:[#allocation9] sm:$0xff]
          %v477 = vld [vmem:[#allocation9 + $0x8] sm:$0xff]
          %v478 = vld [vmem:[#allocation9 + $0x10] sm:$0xff]
          %v479 = vld [vmem:[#allocation9 + $0x18] sm:$0xff]
          %v480 = vld [vmem:[#allocation2] sm:$0xff]
          %v481 = vld [vmem:[#allocation2 + $0x8] sm:$0xff]
          %v482 = vld [vmem:[#allocation2 + $0x10] sm:$0xff]
          %v483 = vld [vmem:[#allocation2 + $0x18] sm:$0xff]
          %v484 = vld [vmem:[#allocation2 + $0x20] sm:$0xff]
          %v485 = vld [vmem:[#allocation2 + $0x28] sm:$0xff]
          %v486 = vld [vmem:[#allocation2 + $0x30] sm:$0xff]
          %v487 = vld [vmem:[#allocation2 + $0x38] sm:$0xff]
          %vm488 = vcmask 523264
          %v490 = vsel %vm488, %v476, 0
          %v493 = vsel %vm488, %v477, 0
          %v496 = vsel %vm488, %v478, 0
          %v499 = vsel %vm488, %v479, 0
          %501 = vmatprep.subr.mxu0 0.0
          %502 = vmatpush1.msra.mxu0 %v480
          %503 = vmatprep.subr.mxu0 0.0
          %504 = vmatpush1.msra.mxu0 %v481
          %505 = vmatprep.subr.mxu0 0.0
          %506 = vmatpush1.msra.mxu0 %v482
          %507 = vmatprep.subr.mxu0 0.0
          %508 = vmatpush1.msra.mxu0 %v483
          %509 = vmatprep.subr.mxu0 0.0
          %510 = vmatpush1.msra.mxu0 %v484
          %511 = vmatprep.subr.mxu0 0.0
          %512 = vmatpush1.msra.mxu0 %v485
          %513 = vmatprep.subr.mxu0 0.0
          %514 = vmatpush1.msra.mxu0 %v486
          %515 = vmatprep.subr.mxu0 0.0
          %516 = vmatpush1.msra.mxu0 %v487
          %517 = vmatprep.subr.mxu0 0.0
          %518 = vmatpush1.msra.mxu0 0.0
          %519 = vmatprep.subr.mxu0 0.0
          %520 = vmatpush1.msra.mxu0 0.0
          %521 = vmatprep.subr.mxu0 0.0
          %522 = vmatpush1.msra.mxu0 0.0
          %523 = vmatprep.subr.mxu0 0.0
          %524 = vmatpush1.msra.mxu0 0.0
          %525 = vmatprep.subr.mxu0 0.0
          %526 = vmatpush1.msra.mxu0 0.0
          %527 = vmatprep.subr.mxu0 0.0
          %528 = vmatpush1.msra.mxu0 0.0
          %529 = vmatprep.subr.mxu0 0.0
          %530 = vmatpush1.msra.mxu0 0.0
          %531 = vmatprep.subr.mxu0 0.0
          %532 = vmatpush1.msra.mxu0 0.0
          %533 = vmatprep.subr.mxu0 0.0
          %534 = vmatpush1.msra.mxu0 0.0
          %535 = vmatprep.subr.mxu0 0.0
          %536 = vmatpush1.msra.mxu0 0.0
          %537 = vmatprep.subr.mxu0 0.0
          %538 = vmatpush1.msra.mxu0 0.0
          %539 = vmatprep.subr.mxu0 0.0
          %540 = vmatpush1.msra.mxu0 0.0
          %541 = vmatprep.subr.mxu0 0.0
          %542 = vmatpush1.msra.mxu0 0.0
          %543 = vmatprep.subr.mxu0 0.0
          %544 = vmatpush1.msra.mxu0 0.0
          %545 = vmatprep.subr.mxu0 0.0
          %546 = vmatpush1.msra.mxu0 0.0
          %547 = vmatprep.subr.mxu0 0.0
          %548 = vmatpush1.msra.mxu0 0.0
          %549 = vmatprep.subr.mxu0 0.0
          %550 = vmatpush1.msra.mxu0 0.0
          %551 = vmatprep.subr.mxu0 0.0
          %552 = vmatpush1.msra.mxu0 0.0
          %553 = vmatprep.subr.mxu0 0.0
          %554 = vmatpush1.msra.mxu0 0.0
          %555 = vmatprep.subr.mxu0 0.0
          %556 = vmatpush1.msra.mxu0 0.0
          %557 = vmatprep.subr.mxu0 0.0
          %558 = vmatpush1.msra.mxu0 0.0
          %559 = vmatprep.subr.mxu0 0.0
          %560 = vmatpush1.msra.mxu0 0.0
          %561 = vmatprep.subr.mxu0 0.0
          %562 = vmatpush1.msra.mxu0 0.0
          %563 = vmatprep.subr.mxu0 0.0
          %564 = vmatpush1.msra.mxu0 0.0
          %565 = vmatprep.mubr.f32.mxu0 0.0
          %566 = vmatmul.mubr.f32.gmra.mrb[0].mxu0 %v490
          %v567 = vpop.f32.mrb[0].mxu0
          %v568 = vadd.f32 0.0, %v567
          %v569 = vpop.f32.mrb[0].mxu0
          %570 = vmatprep.mubr.f32.mxu0 0.0
          %571 = vmatmul.mubr.f32.gmra.mrb[0].mxu0 %v493
          %v572 = vpop.f32.mrb[0].mxu0
          %v573 = vadd.f32 0.0, %v572
          %v574 = vpop.f32.mrb[0].mxu0
          %575 = vmatprep.mubr.f32.mxu0 0.0
          %576 = vmatmul.mubr.f32.gmra.mrb[0].mxu0 %v496
          %v577 = vpop.f32.mrb[0].mxu0
          %v578 = vadd.f32 0.0, %v577
          %v579 = vpop.f32.mrb[0].mxu0
          %580 = vmatprep.mubr.f32.mxu0 0.0
          %581 = vmatmul.mubr.f32.gmra.mrb[0].mxu0 %v499
          %v582 = vpop.f32.mrb[0].mxu0
          %v583 = vadd.f32 0.0, %v582
          %v584 = vpop.f32.mrb[0].mxu0
          %585 = vdwg.mxu0
          %v586 = vld [vmem:[#allocation3] sm:$0xff]
          %v587 = vld [vmem:[#allocation3 + $0x8] sm:$0xff]
          %v588 = vld [vmem:[#allocation3 + $0x10] sm:$0xff]
          %v589 = vld [vmem:[#allocation3 + $0x18] sm:$0xff]
          %v590 = vld [vmem:[#allocation3 + $0x20] sm:$0xff]
          %v591 = vld [vmem:[#allocation3 + $0x28] sm:$0xff]
          %v592 = vld [vmem:[#allocation3 + $0x30] sm:$0xff]
          %v593 = vld [vmem:[#allocation3 + $0x38] sm:$0xff]
          %594 = vmatprep.subr.mxu0 0.0
          %595 = vmatpush1.msra.mxu0 %v586
          %596 = vmatprep.subr.mxu0 0.0
          %597 = vmatpush1.msra.mxu0 %v587
          %598 = vmatprep.subr.mxu0 0.0
          %599 = vmatpush1.msra.mxu0 %v588
          %600 = vmatprep.subr.mxu0 0.0
          %601 = vmatpush1.msra.mxu0 %v589
          %602 = vmatprep.subr.mxu0 0.0
          %603 = vmatpush1.msra.mxu0 %v590
          %604 = vmatprep.subr.mxu0 0.0
          %605 = vmatpush1.msra.mxu0 %v591
          %606 = vmatprep.subr.mxu0 0.0
          %607 = vmatpush1.msra.mxu0 %v592
          %608 = vmatprep.subr.mxu0 0.0
          %609 = vmatpush1.msra.mxu0 %v593
          %610 = vmatprep.subr.mxu0 0.0
          %611 = vmatpush1.msra.mxu0 0.0
          %612 = vmatprep.subr.mxu0 0.0
          %613 = vmatpush1.msra.mxu0 0.0
          %614 = vmatprep.subr.mxu0 0.0
          %615 = vmatpush1.msra.mxu0 0.0
          %616 = vmatprep.subr.mxu0 0.0
          %617 = vmatpush1.msra.mxu0 0.0
          %618 = vmatprep.subr.mxu0 0.0
          %619 = vmatpush1.msra.mxu0 0.0
          %620 = vmatprep.subr.mxu0 0.0
          %621 = vmatpush1.msra.mxu0 0.0
          %622 = vmatprep.subr.mxu0 0.0
          %623 = vmatpush1.msra.mxu0 0.0
          %624 = vmatprep.subr.mxu0 0.0
          %625 = vmatpush1.msra.mxu0 0.0
          %626 = vmatprep.subr.mxu0 0.0
          %627 = vmatpush1.msra.mxu0 0.0
          %628 = vmatprep.subr.mxu0 0.0
          %629 = vmatpush1.msra.mxu0 0.0
          %630 = vmatprep.subr.mxu0 0.0
          %631 = vmatpush1.msra.mxu0 0.0
          %632 = vmatprep.subr.mxu0 0.0
          %633 = vmatpush1.msra.mxu0 0.0
          %634 = vmatprep.subr.mxu0 0.0
          %635 = vmatpush1.msra.mxu0 0.0
          %636 = vmatprep.subr.mxu0 0.0
          %637 = vmatpush1.msra.mxu0 0.0
          %638 = vmatprep.subr.mxu0 0.0
          %639 = vmatpush1.msra.mxu0 0.0
          %640 = vmatprep.subr.mxu0 0.0
          %641 = vmatpush1.msra.mxu0 0.0
          %642 = vmatprep.subr.mxu0 0.0
          %643 = vmatpush1.msra.mxu0 0.0
          %644 = vmatprep.subr.mxu0 0.0
          %645 = vmatpush1.msra.mxu0 0.0
          %646 = vmatprep.subr.mxu0 0.0
          %647 = vmatpush1.msra.mxu0 0.0
          %648 = vmatprep.subr.mxu0 0.0
          %649 = vmatpush1.msra.mxu0 0.0
          %650 = vmatprep.subr.mxu0 0.0
          %651 = vmatpush1.msra.mxu0 0.0
          %652 = vmatprep.subr.mxu0 0.0
          %653 = vmatpush1.msra.mxu0 0.0
          %654 = vmatprep.subr.mxu0 0.0
          %655 = vmatpush1.msra.mxu0 0.0
          %656 = vmatprep.subr.mxu0 0.0
          %657 = vmatpush1.msra.mxu0 0.0
          %658 = vmatprep.mubr.f32.mxu0 0.0
          %659 = vmatmul.mubr.f32.gmra.mrb[0].mxu0 %v490
          %v660 = vpop.f32.mrb[0].mxu0
          %v661 = vadd.f32 0.0, %v660
          %v662 = vpop.f32.mrb[0].mxu0
          %663 = vmatprep.mubr.f32.mxu0 0.0
          %664 = vmatmul.mubr.f32.gmra.mrb[0].mxu0 %v493
          %v665 = vpop.f32.mrb[0].mxu0
          %v666 = vadd.f32 0.0, %v665
          %v667 = vpop.f32.mrb[0].mxu0
          %668 = vmatprep.mubr.f32.mxu0 0.0
          %669 = vmatmul.mubr.f32.gmra.mrb[0].mxu0 %v496
          %v670 = vpop.f32.mrb[0].mxu0
          %v671 = vadd.f32 0.0, %v670
          %v672 = vpop.f32.mrb[0].mxu0
          %673 = vmatprep.mubr.f32.mxu0 0.0
          %674 = vmatmul.mubr.f32.gmra.mrb[0].mxu0 %v499
          %v675 = vpop.f32.mrb[0].mxu0
          %v676 = vadd.f32 0.0, %v675
          %v677 = vpop.f32.mrb[0].mxu0
          %678 = vdwg.mxu0
          %v679 = vmul.f32 %v568, 0.001953125
          %v680 = vmul.f32 %v573, 0.001953125
          %v681 = vmul.f32 %v578, 0.001953125
          %v682 = vmul.f32 %v583, 0.001953125
          %v683 = vmul.f32 %v661, 0.001953125
          %v684 = vmul.f32 %v666, 0.001953125
          %v685 = vmul.f32 %v671, 0.001953125
          %v686 = vmul.f32 %v676, 0.001953125
          %v687 = vmul.f32 %v679, %v679
          %v688 = vmul.f32 %v680, %v680
          %v689 = vmul.f32 %v681, %v681
          %v690 = vmul.f32 %v682, %v682
          %v691 = vsub.f32 %v683, %v687
          %v692 = vsub.f32 %v684, %v688
          %v693 = vsub.f32 %v685, %v689
          %v694 = vsub.f32 %v686, %v690
          %v695 = vadd.f32 %v691, 1e-05
          %v696 = vadd.f32 %v692, 1e-05
          %v697 = vadd.f32 %v693, 1e-05
          %v698 = vadd.f32 %v694, 1e-05
          %v699 = vrsqrt.pop %v695
          %v700 = vrsqrt.pop %v696
          %v701 = vrsqrt.pop %v697
          %v702 = vrsqrt.pop %v698
          %v703 = vld [vmem:[#allocation7] sm:$0xff]
          %v704 = vld [vmem:[#allocation7 + $0x8] sm:$0xff]
          %v705 = vld [vmem:[#allocation7 + $0x10] sm:$0xff]
          %v706 = vld [vmem:[#allocation7 + $0x18] sm:$0xff]
          %v707 = vld [vmem:[#allocation7 + $0x20] sm:$0xff]
          %v708 = vld [vmem:[#allocation7 + $0x28] sm:$0xff]
          %v709 = vld [vmem:[#allocation7 + $0x30] sm:$0xff]
          %v710 = vld [vmem:[#allocation7 + $0x38] sm:$0xff]
          %vm711 = vcmask 261120
          %v713 = vsel %vm711, %v703, 0
          %v716 = vsel %vm711, %v704, 0
          %v719 = vsel %vm711, %v705, 0
          %v722 = vsel %vm711, %v706, 0
          %v725 = vsel %vm711, %v707, 0
          %v728 = vsel %vm711, %v708, 0
          %v731 = vsel %vm711, %v709, 0
          %v734 = vsel %vm711, %v710, 0
          %736 = vmatprep.subr.mxu0 0.0
          %737 = vmatpush1.msra.mxu0 %v679
          %738 = vmatprep.subr.mxu0 0.0
          %739 = vmatpush1.msra.mxu0 %v680
          %740 = vmatprep.subr.mxu0 0.0
          %741 = vmatpush1.msra.mxu0 %v681
          %742 = vmatprep.subr.mxu0 0.0
          %743 = vmatpush1.msra.mxu0 %v682
          %744 = vmatprep.subr.mxu0 0.0
          %745 = vmatpush1.msra.mxu0 0.0
          %746 = vmatprep.subr.mxu0 0.0
          %747 = vmatpush1.msra.mxu0 0.0
          %748 = vmatprep.subr.mxu0 0.0
          %749 = vmatpush1.msra.mxu0 0.0
          %750 = vmatprep.subr.mxu0 0.0
          %751 = vmatpush1.msra.mxu0 0.0
          %752 = vmatprep.subr.mxu0 0.0
          %753 = vmatpush1.msra.mxu0 0.0
          %754 = vmatprep.subr.mxu0 0.0
          %755 = vmatpush1.msra.mxu0 0.0
          %756 = vmatprep.subr.mxu0 0.0
          %757 = vmatpush1.msra.mxu0 0.0
          %758 = vmatprep.subr.mxu0 0.0
          %759 = vmatpush1.msra.mxu0 0.0
          %760 = vmatprep.subr.mxu0 0.0
          %761 = vmatpush1.msra.mxu0 0.0
          %762 = vmatprep.subr.mxu0 0.0
          %763 = vmatpush1.msra.mxu0 0.0
          %764 = vmatprep.subr.mxu0 0.0
          %765 = vmatpush1.msra.mxu0 0.0
          %766 = vmatprep.subr.mxu0 0.0
          %767 = vmatpush1.msra.mxu0 0.0
          %768 = vmatprep.subr.mxu0 0.0
          %769 = vmatpush1.msra.mxu0 0.0
          %770 = vmatprep.subr.mxu0 0.0
          %771 = vmatpush1.msra.mxu0 0.0
          %772 = vmatprep.subr.mxu0 0.0
          %773 = vmatpush1.msra.mxu0 0.0
          %774 = vmatprep.subr.mxu0 0.0
          %775 = vmatpush1.msra.mxu0 0.0
          %776 = vmatprep.subr.mxu0 0.0
          %777 = vmatpush1.msra.mxu0 0.0
          %778 = vmatprep.subr.mxu0 0.0
          %779 = vmatpush1.msra.mxu0 0.0
          %780 = vmatprep.subr.mxu0 0.0
          %781 = vmatpush1.msra.mxu0 0.0
          %782 = vmatprep.subr.mxu0 0.0
          %783 = vmatpush1.msra.mxu0 0.0
          %784 = vmatprep.subr.mxu0 0.0
          %785 = vmatpush1.msra.mxu0 0.0
          %786 = vmatprep.subr.mxu0 0.0
          %787 = vmatpush1.msra.mxu0 0.0
          %788 = vmatprep.subr.mxu0 0.0
          %789 = vmatpush1.msra.mxu0 0.0
          %790 = vmatprep.subr.mxu0 0.0
          %791 = vmatpush1.msra.mxu0 0.0
          %792 = vmatprep.subr.mxu0 0.0
          %793 = vmatpush1.msra.mxu0 0.0
          %794 = vmatprep.subr.mxu0 0.0
          %795 = vmatpush1.msra.mxu0 0.0
          %796 = vmatprep.subr.mxu0 0.0
          %797 = vmatpush1.msra.mxu0 0.0
          %798 = vmatprep.subr.mxu0 0.0
          %799 = vmatpush1.msra.mxu0 0.0
          %800 = vmatprep.mubr.f32.mxu0 0.0
          %801 = vmatmul.mubr.f32.gmra.mrb[0].mxu0 %v713
          %v802 = vpop.f32.mrb[0].mxu0
          %v803 = vadd.f32 0.0, %v802
          %v804 = vpop.f32.mrb[0].mxu0
          %805 = vmatprep.mubr.f32.mxu0 0.0
          %806 = vmatmul.mubr.f32.gmra.mrb[0].mxu0 %v716
          %v807 = vpop.f32.mrb[0].mxu0
          %v808 = vadd.f32 0.0, %v807
          %v809 = vpop.f32.mrb[0].mxu0
          %810 = vmatprep.mubr.f32.mxu0 0.0
          %811 = vmatmul.mubr.f32.gmra.mrb[0].mxu0 %v719
          %v812 = vpop.f32.mrb[0].mxu0
          %v813 = vadd.f32 0.0, %v812
          %v814 = vpop.f32.mrb[0].mxu0
          %815 = vmatprep.mubr.f32.mxu0 0.0
          %816 = vmatmul.mubr.f32.gmra.mrb[0].mxu0 %v722
          %v817 = vpop.f32.mrb[0].mxu0
          %v818 = vadd.f32 0.0, %v817
          %v819 = vpop.f32.mrb[0].mxu0
          %820 = vmatprep.mubr.f32.mxu0 0.0
          %821 = vmatmul.mubr.f32.gmra.mrb[0].mxu0 %v725
          %v822 = vpop.f32.mrb[0].mxu0
          %v823 = vadd.f32 0.0, %v822
          %v824 = vpop.f32.mrb[0].mxu0
          %825 = vmatprep.mubr.f32.mxu0 0.0
          %826 = vmatmul.mubr.f32.gmra.mrb[0].mxu0 %v728
          %v827 = vpop.f32.mrb[0].mxu0
          %v828 = vadd.f32 0.0, %v827
          %v829 = vpop.f32.mrb[0].mxu0
          %830 = vmatprep.mubr.f32.mxu0 0.0
          %831 = vmatmul.mubr.f32.gmra.mrb[0].mxu0 %v731
          %v832 = vpop.f32.mrb[0].mxu0
          %v833 = vadd.f32 0.0, %v832
          %v834 = vpop.f32.mrb[0].mxu0
          %835 = vmatprep.mubr.f32.mxu0 0.0
          %836 = vmatmul.mubr.f32.gmra.mrb[0].mxu0 %v734
          %v837 = vpop.f32.mrb[0].mxu0
          %v838 = vadd.f32 0.0, %v837
          %v839 = vpop.f32.mrb[0].mxu0
          %840 = vdwg.mxu0
          %841 = vmatprep.subr.mxu0 0.0
          %842 = vmatpush1.msra.mxu0 %v699
          %843 = vmatprep.subr.mxu0 0.0
          %844 = vmatpush1.msra.mxu0 %v700
          %845 = vmatprep.subr.mxu0 0.0
          %846 = vmatpush1.msra.mxu0 %v701
          %847 = vmatprep.subr.mxu0 0.0
          %848 = vmatpush1.msra.mxu0 %v702
          %849 = vmatprep.subr.mxu0 0.0
          %850 = vmatpush1.msra.mxu0 0.0
          %851 = vmatprep.subr.mxu0 0.0
          %852 = vmatpush1.msra.mxu0 0.0
          %853 = vmatprep.subr.mxu0 0.0
          %854 = vmatpush1.msra.mxu0 0.0
          %855 = vmatprep.subr.mxu0 0.0
          %856 = vmatpush1.msra.mxu0 0.0
          %857 = vmatprep.subr.mxu0 0.0
          %858 = vmatpush1.msra.mxu0 0.0
          %859 = vmatprep.subr.mxu0 0.0
          %860 = vmatpush1.msra.mxu0 0.0
          %861 = vmatprep.subr.mxu0 0.0
          %862 = vmatpush1.msra.mxu0 0.0
          %863 = vmatprep.subr.mxu0 0.0
          %864 = vmatpush1.msra.mxu0 0.0
          %865 = vmatprep.subr.mxu0 0.0
          %866 = vmatpush1.msra.mxu0 0.0
          %867 = vmatprep.subr.mxu0 0.0
          %868 = vmatpush1.msra.mxu0 0.0
          %869 = vmatprep.subr.mxu0 0.0
          %870 = vmatpush1.msra.mxu0 0.0
          %871 = vmatprep.subr.mxu0 0.0
          %872 = vmatpush1.msra.mxu0 0.0
          %873 = vmatprep.subr.mxu0 0.0
          %874 = vmatpush1.msra.mxu0 0.0
          %875 = vmatprep.subr.mxu0 0.0
          %876 = vmatpush1.msra.mxu0 0.0
          %877 = vmatprep.subr.mxu0 0.0
          %878 = vmatpush1.msra.mxu0 0.0
          %879 = vmatprep.subr.mxu0 0.0
          %880 = vmatpush1.msra.mxu0 0.0
          %881 = vmatprep.subr.mxu0 0.0
          %882 = vmatpush1.msra.mxu0 0.0
          %883 = vmatprep.subr.mxu0 0.0
          %884 = vmatpush1.msra.mxu0 0.0
          %885 = vmatprep.subr.mxu0 0.0
          %886 = vmatpush1.msra.mxu0 0.0
          %887 = vmatprep.subr.mxu0 0.0
          %888 = vmatpush1.msra.mxu0 0.0
          %889 = vmatprep.subr.mxu0 0.0
          %890 = vmatpush1.msra.mxu0 0.0
          %891 = vmatprep.subr.mxu0 0.0
          %892 = vmatpush1.msra.mxu0 0.0
          %893 = vmatprep.subr.mxu0 0.0
          %894 = vmatpush1.msra.mxu0 0.0
          %895 = vmatprep.subr.mxu0 0.0
          %896 = vmatpush1.msra.mxu0 0.0
          %897 = vmatprep.subr.mxu0 0.0
          %898 = vmatpush1.msra.mxu0 0.0
          %899 = vmatprep.subr.mxu0 0.0
          %900 = vmatpush1.msra.mxu0 0.0
          %901 = vmatprep.subr.mxu0 0.0
          %902 = vmatpush1.msra.mxu0 0.0
          %903 = vmatprep.subr.mxu0 0.0
          %904 = vmatpush1.msra.mxu0 0.0
          %905 = vmatprep.mubr.f32.mxu0 0.0
          %906 = vmatmul.mubr.f32.gmra.mrb[0].mxu0 %v713
          %v907 = vpop.f32.mrb[0].mxu0
          %v908 = vadd.f32 0.0, %v907
          %v909 = vpop.f32.mrb[0].mxu0
          %910 = vmatprep.mubr.f32.mxu0 0.0
          %911 = vmatmul.mubr.f32.gmra.mrb[0].mxu0 %v716
          %v912 = vpop.f32.mrb[0].mxu0
          %v913 = vadd.f32 0.0, %v912
          %v914 = vpop.f32.mrb[0].mxu0
          %915 = vmatprep.mubr.f32.mxu0 0.0
          %916 = vmatmul.mubr.f32.gmra.mrb[0].mxu0 %v719
          %v917 = vpop.f32.mrb[0].mxu0
          %v918 = vadd.f32 0.0, %v917
          %v919 = vpop.f32.mrb[0].mxu0
          %920 = vmatprep.mubr.f32.mxu0 0.0
          %921 = vmatmul.mubr.f32.gmra.mrb[0].mxu0 %v722
          %v922 = vpop.f32.mrb[0].mxu0
          %v923 = vadd.f32 0.0, %v922
          %v924 = vpop.f32.mrb[0].mxu0
          %925 = vmatprep.mubr.f32.mxu0 0.0
          %926 = vmatmul.mubr.f32.gmra.mrb[0].mxu0 %v725
          %v927 = vpop.f32.mrb[0].mxu0
          %v928 = vadd.f32 0.0, %v927
          %v929 = vpop.f32.mrb[0].mxu0
          %930 = vmatprep.mubr.f32.mxu0 0.0
          %931 = vmatmul.mubr.f32.gmra.mrb[0].mxu0 %v728
          %v932 = vpop.f32.mrb[0].mxu0
          %v933 = vadd.f32 0.0, %v932
          %v934 = vpop.f32.mrb[0].mxu0
          %935 = vmatprep.mubr.f32.mxu0 0.0
          %936 = vmatmul.mubr.f32.gmra.mrb[0].mxu0 %v731
          %v937 = vpop.f32.mrb[0].mxu0
          %v938 = vadd.f32 0.0, %v937
          %v939 = vpop.f32.mrb[0].mxu0
          %940 = vmatprep.mubr.f32.mxu0 0.0
          %941 = vmatmul.mubr.f32.gmra.mrb[0].mxu0 %v734
          %v942 = vpop.f32.mrb[0].mxu0
          %v943 = vadd.f32 0.0, %v942
          %v944 = vpop.f32.mrb[0].mxu0
          %945 = vdwg.mxu0
          %v946 = vld [vmem:[#allocation10] sm:$0xff]
          %v947 = vld [vmem:[#allocation10 + $0x8] sm:$0xff]
          %v948 = vld [vmem:[#allocation10 + $0x10] sm:$0xff]
          %v949 = vld [vmem:[#allocation10 + $0x18] sm:$0xff]
          %v950 = vld [vmem:[#allocation10 + $0x20] sm:$0xff]
          %v951 = vld [vmem:[#allocation10 + $0x28] sm:$0xff]
          %v952 = vld [vmem:[#allocation10 + $0x30] sm:$0xff]
          %v953 = vld [vmem:[#allocation10 + $0x38] sm:$0xff]
          %v954 = vmul.f32 %v946, %v908
          %v955 = vmul.f32 %v947, %v913
          %v956 = vmul.f32 %v948, %v918
          %v957 = vmul.f32 %v949, %v923
          %v958 = vmul.f32 %v950, %v928
          %v959 = vmul.f32 %v951, %v933
          %v960 = vmul.f32 %v952, %v938
          %v961 = vmul.f32 %v953, %v943
          %962 = vst.msk [vmem:[%s346] sm:$0xff] %vm415, %v954
          %963 = vst.msk [vmem:[%s346 + $0x8] sm:$0xff] %vm415, %v955
          %964 = vst.msk [vmem:[%s346 + $0x10] sm:$0xff] %vm415, %v956
          %965 = vst.msk [vmem:[%s346 + $0x18] sm:$0xff] %vm415, %v957
          %966 = vst.msk [vmem:[%s346 + $0x20] sm:$0xff] %vm415, %v958
          %967 = vst.msk [vmem:[%s346 + $0x28] sm:$0xff] %vm415, %v959
          %968 = vst.msk [vmem:[%s346 + $0x30] sm:$0xff] %vm415, %v960
          %969 = vst.msk [vmem:[%s346 + $0x38] sm:$0xff] %vm415, %v961
          %v970 = vld [vmem:[#allocation12] sm:$0xff]
          %v971 = vld [vmem:[#allocation12 + $0x8] sm:$0xff]
          %v972 = vld [vmem:[#allocation12 + $0x10] sm:$0xff]
          %v973 = vld [vmem:[#allocation12 + $0x18] sm:$0xff]
          %v974 = vld [vmem:[#allocation12 + $0x20] sm:$0xff]
          %v975 = vld [vmem:[#allocation12 + $0x28] sm:$0xff]
          %v976 = vld [vmem:[#allocation12 + $0x30] sm:$0xff]
          %v977 = vld [vmem:[#allocation12 + $0x38] sm:$0xff]
          %v978 = vld [vmem:[#allocation10] sm:$0xff]
          %v979 = vld [vmem:[#allocation10 + $0x8] sm:$0xff]
          %v980 = vld [vmem:[#allocation10 + $0x10] sm:$0xff]
          %v981 = vld [vmem:[#allocation10 + $0x18] sm:$0xff]
          %v982 = vld [vmem:[#allocation10 + $0x20] sm:$0xff]
          %v983 = vld [vmem:[#allocation10 + $0x28] sm:$0xff]
          %v984 = vld [vmem:[#allocation10 + $0x30] sm:$0xff]
          %v985 = vld [vmem:[#allocation10 + $0x38] sm:$0xff]
          %v986 = vmul.f32 %v978, %v908
          %v987 = vmul.f32 %v979, %v913
          %v988 = vmul.f32 %v980, %v918
          %v989 = vmul.f32 %v981, %v923
          %v990 = vmul.f32 %v982, %v928
          %v991 = vmul.f32 %v983, %v933
          %v992 = vmul.f32 %v984, %v938
          %v993 = vmul.f32 %v985, %v943
          %v994 = vmul.f32 %v986, %v803
          %v995 = vmul.f32 %v987, %v808
          %v996 = vmul.f32 %v988, %v813
          %v997 = vmul.f32 %v989, %v818
          %v998 = vmul.f32 %v990, %v823
          %v999 = vmul.f32 %v991, %v828
          %v1000 = vmul.f32 %v992, %v833
          %v1001 = vmul.f32 %v993, %v838
          %v1002 = vsub.f32 %v970, %v994
          %v1003 = vsub.f32 %v971, %v995
          %v1004 = vsub.f32 %v972, %v996
          %v1005 = vsub.f32 %v973, %v997
          %v1006 = vsub.f32 %v974, %v998
          %v1007 = vsub.f32 %v975, %v999
          %v1008 = vsub.f32 %v976, %v1000
          %v1009 = vsub.f32 %v977, %v1001
          %1010 = vst.msk [vmem:[%s353] sm:$0xff] %vm415, %v1002
          %1011 = vst.msk [vmem:[%s353 + $0x8] sm:$0xff] %vm415, %v1003
          %1012 = vst.msk [vmem:[%s353 + $0x10] sm:$0xff] %vm415, %v1004
          %1013 = vst.msk [vmem:[%s353 + $0x18] sm:$0xff] %vm415, %v1005
          %1014 = vst.msk [vmem:[%s353 + $0x20] sm:$0xff] %vm415, %v1006
          %1015 = vst.msk [vmem:[%s353 + $0x28] sm:$0xff] %vm415, %v1007
          %1016 = vst.msk [vmem:[%s353 + $0x30] sm:$0xff] %vm415, %v1008
          %1017 = vst.msk [vmem:[%s353 + $0x38] sm:$0xff] %vm415, %v1009
        $region68: #{tpu_custom_call.1} parent=39 // pred_fallthru
          _
        %s1018 = sand.u32 %s161, 1
        %s1019 = scalar_lea.sflag [#allocation6], %s1018
        %s1020 = sand.u32 %s161, 1
        %s1021 = smul.addr %s1020, 64
        %s1022 = scalar_lea.vmem [#allocation13], %s1021
        %s1023 = sand.u32 %s187, 1
        %s1024 = scalar_lea.sflag [#allocation15], %s1023
        %s1025 = sand.u32 %s187, 1
        %s1026 = smul.addr %s1025, 64
        %s1027 = scalar_lea.vmem [#allocation14], %s1026
        // Predicated region
        $region69: #{tpu_custom_call.1} parent=39 // pred_check
          %p1028 = pneg %p171
        $region70: #{tpu_custom_call.1} parent=39 // pred_check_branch
          %1030 = sbr.rel (%p1028) target = $region72
        $region71: #{tpu_custom_call.1} parent=39 // pred_region
          %s1032 = ssub.s32 1024, 1024
          %1033 = vsyncadd %s1019, %s1032
          %s1034 = smul.addr %s33, 8
          %s1035 = smul.addr %s1034, 128
          %s1036 = scalar_lea.hbm %s5, %s1035
          %s1037 = sshll.u32 %s1022, 4
          %s1038 = int_to_ptr.vmem [resolvable:$true] %s1037
          %1043 = dma.vmem_to_hbm [thread:$0]  %s1038, 1024, %s1036, %s1019, 128, 128, 8
        $region72: #{tpu_custom_call.1} parent=39 // pred_fallthru
          _
        // Predicated region
        $region73: #{tpu_custom_call.1} parent=39 // pred_check
          %p1044 = pneg %p197
        $region74: #{tpu_custom_call.1} parent=39 // pred_check_branch
          %1046 = sbr.rel (%p1044) target = $region76
        $region75: #{tpu_custom_call.1} parent=39 // pred_region
          %s1048 = ssub.s32 1024, 1024
          %1049 = vsyncadd %s1024, %s1048
          %s1050 = smul.addr %s33, 8
          %s1051 = smul.addr %s1050, 128
          %s1052 = scalar_lea.hbm %s6, %s1051
          %s1053 = sshll.u32 %s1027, 4
          %s1054 = int_to_ptr.vmem [resolvable:$true] %s1053
          %1059 = dma.vmem_to_hbm [thread:$0]  %s1054, 1024, %s1052, %s1024, 128, 128, 8
        $region76: #{tpu_custom_call.1} parent=39 // pred_fallthru
          _
      $region40: #{tpu_custom_call.1} parent=5 // pred_fallthru
        _
      %p1060 = scmp.le.s32.totalorder 2, %s24
      // Predicated region
      $region77: #{tpu_custom_call.1} parent=5 // pred_check
        %p1061 = pneg %p1060
      $region78: #{tpu_custom_call.1} parent=5 // pred_check_branch
        %1063 = sbr.rel (%p1061) target = $region80
      $region79: #{tpu_custom_call.1} parent=5 // pred_region
        %s1064 = ssub.s32 %s24, 2
        // Predicated region
        $region81: #{tpu_custom_call.1} parent=79 // pred_check
          %p1065 = pneg %p177
        $region82: #{tpu_custom_call.1} parent=79 // pred_check_branch
          %1067 = sbr.rel (%p1065) target = $region84
        $region83: #{tpu_custom_call.1} parent=79 // pred_region
          %s1068 = sand.u32 %s162, 1
          %s1069 = scalar_lea.sflag [#allocation6], %s1068
          %s1070 = sand.u32 %s162, 1
          %s1071 = smul.addr %s1070, 64
          %s1072 = scalar_lea.vmem [#allocation13], %s1071
          %1073 = dma.done %s1069, 1024
        $region84: #{tpu_custom_call.1} parent=79 // pred_fallthru
          _
        // Predicated region
        $region85: #{tpu_custom_call.1} parent=79 // pred_check
          %p1074 = pneg %p203
        $region86: #{tpu_custom_call.1} parent=79 // pred_check_branch
          %1076 = sbr.rel (%p1074) target = $region88
        $region87: #{tpu_custom_call.1} parent=79 // pred_region
          %s1077 = sand.u32 %s188, 1
          %s1078 = scalar_lea.sflag [#allocation15], %s1077
          %s1079 = sand.u32 %s188, 1
          %s1080 = smul.addr %s1079, 64
          %s1081 = scalar_lea.vmem [#allocation14], %s1080
          %1082 = dma.done %s1078, 1024
        $region88: #{tpu_custom_call.1} parent=79 // pred_fallthru
          _
      $region80: #{tpu_custom_call.1} parent=5 // pred_fallthru
        _
    $region6: #{tpu_custom_call.1} parent=1 // loop_footer
      %s28 = sadd.s32 1, %s24
    $region7: #{tpu_custom_call.1} parent=1 // loop_footer_branch
      %23 = sbr.rel target = $region3
    $region8: #{tpu_custom_call.1} parent=1 // loop_exit
      _
    %1083 = vsyncpa [#allocation5], 1
    %s1084 = scalar_lea.sflag [#allocation5], 1
    %1085 = vsyncpa %s1084, 1
    %1086 = vsyncpa [#allocation8], 1
    %1087 = vsyncpa [#allocation11], 1
    %1088 = vsyncpa [#allocation6], 1
    %s1089 = scalar_lea.sflag [#allocation6], 1
    %1090 = vsyncpa %s1089, 1
    %1091 = vsyncpa [#allocation15], 1
    %s1092 = scalar_lea.sflag [#allocation15], 1
    %1093 = vsyncpa %s1092, 1

</llo_original>
